<compile_context>
chip_gen: v7x
topology: tpu7x:2x2x1
jax: 0.10.0
libtpu: 0.0.40
codegen_flags: <defaults>
</compile_context>

<pallas_src>
import jax
import jax.numpy as jnp
from jax import lax
from jax.experimental import pallas as pl
from jax.experimental.pallas import tpu as pltpu

NEG_INF_FILL = -1e12


# ------------------------------ fused kernel --------------------------------

def _prediction_kernel(cur_ref, left_ref, flag_ref,
                       wgc_ref, bgate_ref, wgl_ref,
                       enc_ref, attn_we_ref, wnode_ref, bnode_ref,
                       attn_sw_ref, attn_sb_ref, seq_mask_ref,
                       emb_ref, sc_we_ref, sc_sw_ref, wctx_ref, num_mask_ref,
                       node_ref, ctx_ref, nums_ref, ops_ref):
    f32 = jnp.float32
    B, H = cur_ref.shape
    N = emb_ref.shape[1]
    O = wctx_ref.shape[1] - H

    cur = cur_ref[...]                                   # [B, H]
    left = left_ref[...]                                 # [B, H] (zeros where no left child)

    # ---- gate: compute both branches batched, select per row -------------------
    # zc columns: [left_g | left_t | right_g (c-part) | right_t (c-part)]
    zc = jnp.dot(cur, wgc_ref[...], preferred_element_type=f32) + bgate_ref[...]   # [B, 4H]
    zl = jnp.dot(left, wgl_ref[...], preferred_element_type=f32)                   # [B, 2H]
    node_l = jnp.tanh(zc[:, :H]) * jax.nn.sigmoid(zc[:, H:2 * H])
    node_r = (jnp.tanh(zc[:, 2 * H:3 * H] + zl[:, :H])
              * jax.nn.sigmoid(zc[:, 3 * H:] + zl[:, H:]))
    node = jnp.where(flag_ref[...] > 0.5, node_r, node_l)                          # [B, H]
    node_ref[...] = node.astype(node_ref.dtype)

    # ---- node-side projections: attn query | score-leaf(node) | ops(node) ------
    z_node = jnp.dot(node, wnode_ref[...], preferred_element_type=f32) + bnode_ref[...]  # [B, 2H+O]
    q_proj = z_node[:, :H]              # q @ Wq + attn bias
    leaf_node = z_node[:, H:2 * H]      # node @ Wsc_node + sc bias
    op_node = z_node[:, 2 * H:]         # node @ Wops_node + ops bias

    # ---- TreeAttn + context, consumed directly in [S, B, H] layout --------------
    enc = enc_ref[...]                                                              # [S, B, H]
    e_proj = lax.dot_general(enc, attn_we_ref[...], (((2,), (0,)), ((), ())),
                             preferred_element_type=f32)                            # [S, B, H]
    energy = jnp.tanh(q_proj[None, :, :] + e_proj)                                  # [S, B, H]
    # VPU multiply + lane reduce instead of a width-1 MXU matmul.
    s = jnp.sum(energy * attn_sw_ref[...], axis=-1) + attn_sb_ref[...]              # [S, B]
    s = jnp.where(seq_mask_ref[...] > 0.5, NEG_INF_FILL, s)
    m = jnp.max(s, axis=0, keepdims=True)                                           # [1, B]
    p = jnp.exp(s - m)
    denom = jnp.sum(p, axis=0, keepdims=True)                                       # [1, B]
    attn = p * pl.reciprocal(denom, approx=True)                                    # [S, B]
    ctx = jnp.sum(attn[:, :, None] * enc, axis=0)                                   # [B, H]
    ctx_ref[...] = ctx.astype(ctx_ref.dtype)

    # ---- ctx-side projections: score-leaf(ctx) | ops(ctx) -----------------------
    z_ctx = jnp.dot(ctx, wctx_ref[...], preferred_element_type=f32)                 # [B, H+O]
    leaf_proj = leaf_node + z_ctx[:, :H]                                            # [B, H]
    op_logits = op_node + z_ctx[:, H:]                                              # [B, O]

    # ---- Score head over candidate embeddings -----------------------------------
    emb = emb_ref[...]                                                              # [B, N, H]
    emb_proj = lax.dot_general(emb, sc_we_ref[...], (((2,), (0,)), ((), ())),
                               preferred_element_type=f32)                          # [B, N, H]
    energy_n = jnp.tanh(leaf_proj[:, None, :] + emb_proj)                           # [B, N, H]
    s_num = jnp.sum(energy_n * sc_sw_ref[...], axis=-1)                             # [B, N]
    s_num = jnp.where(num_mask_ref[...] > 0.5, NEG_INF_FILL, s_num)

    # ---- lane-dense padded outputs (full-width HBM writeback; sliced in glue) ---
    nums_ref[...] = jnp.zeros(nums_ref.shape, nums_ref.dtype)
    nums_ref[:, :N] = s_num.astype(nums_ref.dtype)
    ops_ref[...] = jnp.zeros(ops_ref.shape, ops_ref.dtype)
    ops_ref[:, :O] = op_logits.astype(ops_ref.dtype)


# --------------------------------- module ------------------------------------

class TreeNode:
    def __init__(self, embedding):
        self.embedding = embedding  # [1, H]


def _init_linear(key, fan_in, fan_out):
    kw, kb = jax.random.split(key)
    w_t = jax.random.normal(kw, (fan_in, fan_out), jnp.float32) / jnp.sqrt(float(fan_in))
    b = jax.random.normal(kb, (1, fan_out), jnp.float32) * 0.01
    return w_t, b  # weight already transposed to [in, out]


class PredictionPallas:
    def __init__(self, hidden_size, op_nums, input_size, key):
        self.hidden_size = H = hidden_size
        self.op_nums = op_nums
        self.input_size = input_size
        ks = iter(jax.random.split(key, 16))

        self.embedding_weight = jax.random.normal(next(ks), (1, input_size, H), jnp.float32)

        wl_t, bl = _init_linear(next(ks), H, H)         # concat_l
        wr_t, br = _init_linear(next(ks), 2 * H, H)     # concat_r
        wlg_t, blg = _init_linear(next(ks), H, H)       # concat_lg
        wrg_t, brg = _init_linear(next(ks), 2 * H, H)   # concat_rg
        ops_wt, ops_b = _init_linear(next(ks), 2 * H, op_nums)

        # TreeAttn(H, H): attn Linear(2H -> H), score Linear(H -> 1, bias)
        attn_wt, attn_b = _init_linear(next(ks), 2 * H, H)
        attn_score_w, attn_score_b = _init_linear(next(ks), H, 1)      # [H,1], [1,1]

        # Score(2H, H): attn Linear(3H -> H), score Linear(H -> 1, no bias)
        sc_wt, sc_b = _init_linear(next(ks), 3 * H, H)
        sc_score_w, _ = _init_linear(next(ks), H, 1)                   # bias=False in torch

        # ---- pre-combined weights (fewer matmuls / weight DMAs inside the kernel) ----
        # Gate: c-side columns [Wl | Wlg | Wr(c rows) | Wrg(c rows)], l-side [Wr(l) | Wrg(l)]
        self.W_gate_c = jnp.concatenate([wl_t, wlg_t, wr_t[H:], wrg_t[H:]], axis=1)   # [H, 4H]
        self.b_gate = jnp.concatenate([bl, blg, br, brg], axis=1)                     # [1, 4H]
        self.W_gate_l = jnp.concatenate([wr_t[:H], wrg_t[:H]], axis=1)                # [H, 2H]

        attn_wq, attn_we = attn_wt[:H], attn_wt[H:]         # (query | encoder) rows
        sc_w_node, sc_w_ctx, sc_we = sc_wt[:H], sc_wt[H:2 * H], sc_wt[2 * H:]
        ops_w_node, ops_w_ctx = ops_wt[:H], ops_wt[H:]

        # node-side head projections: [attn-query | score-leaf(node) | ops(node)]
        self.W_node_all = jnp.concatenate([attn_wq, sc_w_node, ops_w_node], axis=1)   # [H, 2H+O]
        self.b_node_all = jnp.concatenate([attn_b, sc_b, ops_b], axis=1)              # [1, 2H+O]
        # ctx-side head projections: [score-leaf(ctx) | ops(ctx)]
        self.W_ctx_all = jnp.concatenate([sc_w_ctx, ops_w_ctx], axis=1)               # [H, H+O]

        self.attn_we = attn_we                              # [H, H]
        self.attn_score_w_row = attn_score_w.T              # [1, H]  (VPU reduce, not [H,1] matmul)
        self.attn_score_b = attn_score_b                    # [1, 1]
        self.sc_we = sc_we                                  # [H, H]
        self.sc_score_w_row = sc_score_w.T                  # [1, H]

        # TODO(synk): for v6e/v7x, weights/encoder could be held in bf16 (f32 accumulation)
        # to halve DMA bytes; kept f32 here to match the reference numerics exactly.

    def __call__(self, node_stacks, left_childs, encoder_outputs, num_pades,
                 root_representation_Y, seq_mask, mask_nums):
        H = self.hidden_size
        B = len(node_stacks)
        f32 = jnp.float32

        # ---- per-example selection (Python-level, as in torch); batched into arrays ----
        cur_rows, left_rows, flags = [], [], []
        for i in range(B):
            st = node_stacks[i]
            if not st:
                cur_rows.append(root_representation_Y[i])
            else:
                cur_rows.append(jnp.reshape(st[-1].embedding, (H,)))
            l = left_childs[i]
            if l is None:
                left_rows.append(jnp.zeros((H,), f32))
                flags.append(0.0)
            else:
                left_rows.append(jnp.reshape(l, (H,)))
                flags.append(1.0)
        cur = jnp.stack(cur_rows, axis=0)                        # [B, H]
        left = jnp.stack(left_rows, axis=0)                      # [B, H]
        has_left = jnp.array(flags, f32).reshape(B, 1)           # [B, 1]

        # Per-sequence constants (hoistable out of the decode loop in a real decoder).
        embedding_weight = jnp.concatenate(
            [jnp.broadcast_to(self.embedding_weight, (B, self.input_size, H)), num_pades],
            axis=1)                                              # [B, N, H]
        N = embedding_weight.shape[1]
        O = self.op_nums
        seq_mask_t = seq_mask.astype(f32).T                      # [S, B] (encoder kept [S,B,H])
        mask_nums_f = mask_nums.astype(f32)                      # [B, N]

        PAD = 128 * max(1, -(-max(N, O) // 128))                 # lane-dense output width

        out_shapes = (
            jax.ShapeDtypeStruct((B, H), f32),      # current_node
            jax.ShapeDtypeStruct((B, H), f32),      # current_context
            jax.ShapeDtypeStruct((B, PAD), f32),    # num scores (padded slab)
            jax.ShapeDtypeStruct((B, PAD), f32),    # op logits  (padded slab)
        )
        args = (cur, left, has_left,
                self.W_gate_c, self.b_gate, self.W_gate_l,
                encoder_outputs, self.attn_we, self.W_node_all, self.b_node_all,
                self.attn_score_w_row, self.attn_score_b, seq_mask_t,
                embedding_weight, self.sc_we, self.sc_score_w_row,
                self.W_ctx_all, mask_nums_f)

        node, ctx, num_slab, op_slab = pl.pallas_call(
            _prediction_kernel,
            out_shape=out_shapes,
            in_specs=[pl.BlockSpec(memory_space=pltpu.MemorySpace.VMEM)] * len(args),
            out_specs=tuple([pl.BlockSpec(memory_space=pltpu.MemorySpace.VMEM)] * 4),
        )(*args)

        num_score = num_slab[:, :N]
        op = op_slab[:, :O]
        return (num_score, op, node, ctx[:, None, :], embedding_weight)


# ----------------------------------- main -------------------------------------

if __name__ == "__main__":
    B, H, S, INPUT_SIZE, NUM_SIZE, OP_NUMS = 2, 32, 8, 4, 3, 5

    key = jax.random.PRNGKey(0)
    keys = iter(jax.random.split(key, 8))

    model = PredictionPallas(H, OP_NUMS, INPUT_SIZE, next(keys))

    encoder_outputs = jax.random.normal(next(keys), (S, B, H), jnp.float32)   # [S, B, H]
    num_pades = jax.random.normal(next(keys), (B, NUM_SIZE, H), jnp.float32)  # [B, num, H]
    root_Y = jax.random.normal(next(keys), (B, H), jnp.float32)               # [B, H]
    stack_emb = jax.random.normal(next(keys), (1, H), jnp.float32)
    left_emb = jax.random.normal(next(keys), (1, H), jnp.float32)

    seq_mask = jnp.zeros((B, S), jnp.bool_).at[:, S - 2:].set(True)           # pad positions
    mask_nums = jnp.zeros((B, INPUT_SIZE + NUM_SIZE), jnp.bool_).at[0, -1].set(True)

    # exercise both per-example branches: empty stack / stack node, None / real left child
    node_stacks = [[], [TreeNode(stack_emb)]]
    left_childs = [None, left_emb]

    outs = model(node_stacks, left_childs, encoder_outputs, num_pades,
                 root_Y, seq_mask, mask_nums)
    jax.block_until_ready(outs)

    num_score, op, current_node, current_context, embedding_weight = outs
    assert num_score.shape == (B, INPUT_SIZE + NUM_SIZE)
    assert op.shape == (B, OP_NUMS)
    assert current_node.shape == (B, H)
    assert current_context.shape == (B, 1, H)
    assert embedding_weight.shape == (B, INPUT_SIZE + NUM_SIZE, H)
    assert bool(jnp.all(jnp.isfinite(current_node))) and bool(jnp.all(jnp.isfinite(op)))
    print("KERNEL_OK")
</pallas_src>

<mosaic_0001>
module attributes {stable_mosaic.version = 11 : i64} {
  func.func @_prediction_kernel(%arg0: memref<2x32xf32, #tpu.memory_space<vmem>>, %arg1: memref<2x32xf32, #tpu.memory_space<vmem>>, %arg2: memref<2x1xf32, #tpu.memory_space<vmem>>, %arg3: memref<32x128xf32, #tpu.memory_space<vmem>>, %arg4: memref<1x128xf32, #tpu.memory_space<vmem>>, %arg5: memref<32x64xf32, #tpu.memory_space<vmem>>, %arg6: memref<8x2x32xf32, #tpu.memory_space<vmem>>, %arg7: memref<32x32xf32, #tpu.memory_space<vmem>>, %arg8: memref<32x69xf32, #tpu.memory_space<vmem>>, %arg9: memref<1x69xf32, #tpu.memory_space<vmem>>, %arg10: memref<1x32xf32, #tpu.memory_space<vmem>>, %arg11: memref<1x1xf32, #tpu.memory_space<vmem>>, %arg12: memref<8x2xf32, #tpu.memory_space<vmem>>, %arg13: memref<2x7x32xf32, #tpu.memory_space<vmem>>, %arg14: memref<32x32xf32, #tpu.memory_space<vmem>>, %arg15: memref<1x32xf32, #tpu.memory_space<vmem>>, %arg16: memref<32x37xf32, #tpu.memory_space<vmem>>, %arg17: memref<2x7xf32, #tpu.memory_space<vmem>>, %arg18: memref<2x32xf32, #tpu.memory_space<vmem>>, %arg19: memref<2x32xf32, #tpu.memory_space<vmem>>, %arg20: memref<2x128xf32, #tpu.memory_space<vmem>>, %arg21: memref<2x128xf32, #tpu.memory_space<vmem>>) attributes {dimension_semantics = [], scalar_prefetch = 0 : i64, scratch_operands = 0 : i64, tpu.core_type = #tpu.core_type<tc>} {
    %c0 = arith.constant 0 : index
    %c0_0 = arith.constant 0 : index
    %0 = vector.load %arg0[%c0, %c0_0] : memref<2x32xf32, #tpu.memory_space<vmem>>, vector<2x32xf32>
    %c0_1 = arith.constant 0 : index
    %c0_2 = arith.constant 0 : index
    %1 = vector.load %arg1[%c0_1, %c0_2] : memref<2x32xf32, #tpu.memory_space<vmem>>, vector<2x32xf32>
    %c0_3 = arith.constant 0 : index
    %c0_4 = arith.constant 0 : index
    %2 = vector.load %arg3[%c0_3, %c0_4] : memref<32x128xf32, #tpu.memory_space<vmem>>, vector<32x128xf32>
    %cst = arith.constant dense<0.000000e+00> : vector<2x128xf32>
    %3 = tpu.matmul %0, %2, %cst {dimension_numbers = #tpu.dot_dimension_numbers<[1], [0], [0], [1], [0, 0, 1, 1], [], []>} : vector<2x32xf32>, vector<32x128xf32>, vector<2x128xf32> -> vector<2x128xf32>
    %c0_5 = arith.constant 0 : index
    %c0_6 = arith.constant 0 : index
    %4 = vector.load %arg4[%c0_5, %c0_6] : memref<1x128xf32, #tpu.memory_space<vmem>>, vector<1x128xf32>
    %5 = vector.broadcast %4 : vector<1x128xf32> to vector<2x128xf32>
    %6 = arith.addf %3, %5 : vector<2x128xf32>
    %c0_7 = arith.constant 0 : index
    %c0_8 = arith.constant 0 : index
    %7 = vector.load %arg5[%c0_7, %c0_8] : memref<32x64xf32, #tpu.memory_space<vmem>>, vector<32x64xf32>
    %cst_9 = arith.constant dense<0.000000e+00> : vector<2x64xf32>
    %8 = tpu.matmul %1, %7, %cst_9 {dimension_numbers = #tpu.dot_dimension_numbers<[1], [0], [0], [1], [0, 0, 1, 1], [], []>} : vector<2x32xf32>, vector<32x64xf32>, vector<2x64xf32> -> vector<2x64xf32>
    %9 = vector.extract_strided_slice %6 {offsets = [0, 0], sizes = [2, 32], strides = [1, 1]} : vector<2x128xf32> to vector<2x32xf32>
    %10 = math.tanh %9 : vector<2x32xf32>
    %11 = vector.extract_strided_slice %6 {offsets = [0, 32], sizes = [2, 32], strides = [1, 1]} : vector<2x128xf32> to vector<2x32xf32>
    %12 = arith.negf %11 : vector<2x32xf32>
    %13 = math.exp %12 : vector<2x32xf32>
    %cst_10 = arith.constant 1.000000e+00 : f32
    %14 = vector.broadcast %cst_10 : f32 to vector<2x32xf32>
    %15 = arith.addf %14, %13 : vector<2x32xf32>
    %16 = arith.divf %14, %15 : vector<2x32xf32>
    %17 = arith.mulf %10, %16 : vector<2x32xf32>
    %18 = vector.extract_strided_slice %6 {offsets = [0, 64], sizes = [2, 32], strides = [1, 1]} : vector<2x128xf32> to vector<2x32xf32>
    %19 = vector.extract_strided_slice %8 {offsets = [0, 0], sizes = [2, 32], strides = [1, 1]} : vector<2x64xf32> to vector<2x32xf32>
    %20 = arith.addf %18, %19 : vector<2x32xf32>
    %21 = math.tanh %20 : vector<2x32xf32>
    %22 = vector.extract_strided_slice %6 {offsets = [0, 96], sizes = [2, 32], strides = [1, 1]} : vector<2x128xf32> to vector<2x32xf32>
    %23 = vector.extract_strided_slice %8 {offsets = [0, 32], sizes = [2, 32], strides = [1, 1]} : vector<2x64xf32> to vector<2x32xf32>
    %24 = arith.addf %22, %23 : vector<2x32xf32>
    %25 = arith.negf %24 : vector<2x32xf32>
    %26 = math.exp %25 : vector<2x32xf32>
    %cst_11 = arith.constant 1.000000e+00 : f32
    %27 = vector.broadcast %cst_11 : f32 to vector<2x32xf32>
    %28 = arith.addf %27, %26 : vector<2x32xf32>
    %29 = arith.divf %27, %28 : vector<2x32xf32>
    %30 = arith.mulf %21, %29 : vector<2x32xf32>
    %c0_12 = arith.constant 0 : index
    %c0_13 = arith.constant 0 : index
    %31 = vector.load %arg2[%c0_12, %c0_13] : memref<2x1xf32, #tpu.memory_space<vmem>>, vector<2x1xf32>
    %cst_14 = arith.constant 5.000000e-01 : f32
    %32 = vector.broadcast %cst_14 : f32 to vector<2x1xf32>
    %33 = arith.cmpf ogt, %31, %32 : vector<2x1xf32>
    %34 = vector.shape_cast %33 : vector<2x1xi1> to vector<2x1xi1>
    %35 = vector.broadcast %34 : vector<2x1xi1> to vector<2x32xi1>
    %36 = arith.select %35, %30, %17 : vector<2x32xi1>, vector<2x32xf32>
    %c0_15 = arith.constant 0 : index
    %c0_16 = arith.constant 0 : index
    %37 = vector.load %arg18[%c0_15, %c0_16] : memref<2x32xf32, #tpu.memory_space<vmem>>, vector<2x32xf32>
    tpu.vector_store %arg18[%c0_15, %c0_16], %36 {strides = array<i32>} : memref<2x32xf32, #tpu.memory_space<vmem>>, vector<2x32xf32>,
    %c0_17 = arith.constant 0 : index
    %c0_18 = arith.constant 0 : index
    %38 = vector.load %arg8[%c0_17, %c0_18] : memref<32x69xf32, #tpu.memory_space<vmem>>, vector<32x69xf32>
    %cst_19 = arith.constant dense<0.000000e+00> : vector<2x69xf32>
    %39 = tpu.matmul %36, %38, %cst_19 {dimension_numbers = #tpu.dot_dimension_numbers<[1], [0], [0], [1], [0, 0, 1, 1], [], []>} : vector<2x32xf32>, vector<32x69xf32>, vector<2x69xf32> -> vector<2x69xf32>
    %c0_20 = arith.constant 0 : index
    %c0_21 = arith.constant 0 : index
    %40 = vector.load %arg9[%c0_20, %c0_21] : memref<1x69xf32, #tpu.memory_space<vmem>>, vector<1x69xf32>
    %41 = vector.broadcast %40 : vector<1x69xf32> to vector<2x69xf32>
    %42 = arith.addf %39, %41 : vector<2x69xf32>
    %43 = vector.extract_strided_slice %42 {offsets = [0, 0], sizes = [2, 32], strides = [1, 1]} : vector<2x69xf32> to vector<2x32xf32>
    %44 = vector.extract_strided_slice %42 {offsets = [0, 32], sizes = [2, 32], strides = [1, 1]} : vector<2x69xf32> to vector<2x32xf32>
    %45 = vector.extract_strided_slice %42 {offsets = [0, 64], sizes = [2, 5], strides = [1, 1]} : vector<2x69xf32> to vector<2x5xf32>
    %c0_22 = arith.constant 0 : index
    %c0_23 = arith.constant 0 : index
    %c0_24 = arith.constant 0 : index
    %46 = vector.load %arg6[%c0_22, %c0_23, %c0_24] : memref<8x2x32xf32, #tpu.memory_space<vmem>>, vector<8x2x32xf32>
    %c0_25 = arith.constant 0 : index
    %c0_26 = arith.constant 0 : index
    %47 = vector.load %arg7[%c0_25, %c0_26] : memref<32x32xf32, #tpu.memory_space<vmem>>, vector<32x32xf32>
    %cst_27 = arith.constant dense<0.000000e+00> : vector<8x2x32xf32>
    %48 = tpu.matmul %46, %47, %cst_27 {dimension_numbers = #tpu.dot_dimension_numbers<[2], [0], [0, 1], [1], [0, 0, 0, 1, 1, 1], [], []>} : vector<8x2x32xf32>, vector<32x32xf32>, vector<8x2x32xf32> -> vector<8x2x32xf32>
    %49 = vector.shape_cast %43 : vector<2x32xf32> to vector<1x2x32xf32>
    %50 = vector.broadcast %49 : vector<1x2x32xf32> to vector<8x2x32xf32>
    %51 = arith.addf %50, %48 : vector<8x2x32xf32>
    %52 = math.tanh %51 : vector<8x2x32xf32>
    %c0_28 = arith.constant 0 : index
    %c0_29 = arith.constant 0 : index
    %53 = vector.load %arg10[%c0_28, %c0_29] : memref<1x32xf32, #tpu.memory_space<vmem>>, vector<1x32xf32>
    %54 = vector.shape_cast %53 : vector<1x32xf32> to vector<1x1x32xf32>
    %55 = vector.broadcast %54 : vector<1x1x32xf32> to vector<8x2x32xf32>
    %56 = arith.mulf %52, %55 : vector<8x2x32xf32>
    %cst_30 = arith.constant dense<0.000000e+00> : vector<8x2xf32>
    %57 = vector.multi_reduction <add>, %56, %cst_30 [2] : vector<8x2x32xf32> to vector<8x2xf32>
    %c0_31 = arith.constant 0 : index
    %c0_32 = arith.constant 0 : index
    %58 = vector.load %arg11[%c0_31, %c0_32] : memref<1x1xf32, #tpu.memory_space<vmem>>, vector<1x1xf32>
    %59 = vector.broadcast %58 : vector<1x1xf32> to vector<8x2xf32>
    %60 = arith.addf %57, %59 : vector<8x2xf32>
    %c0_33 = arith.constant 0 : index
    %c0_34 = arith.constant 0 : index
    %61 = vector.load %arg12[%c0_33, %c0_34] : memref<8x2xf32, #tpu.memory_space<vmem>>, vector<8x2xf32>
    %cst_35 = arith.constant 5.000000e-01 : f32
    %62 = vector.broadcast %cst_35 : f32 to vector<8x2xf32>
    %63 = arith.cmpf ogt, %61, %62 : vector<8x2xf32>
    %cst_36 = arith.constant -9.99999995E+11 : f32
    %64 = vector.broadcast %cst_36 : f32 to vector<8x2xf32>
    %65 = arith.select %63, %64, %60 : vector<8x2xi1>, vector<8x2xf32>
    %cst_37 = arith.constant dense<0xFF800000> : vector<2xf32>
    %66 = vector.multi_reduction <maximumf>, %65, %cst_37 [0] : vector<8x2xf32> to vector<2xf32>
    %67 = vector.shape_cast %66 : vector<2xf32> to vector<1x2xf32>
    %68 = vector.broadcast %67 : vector<1x2xf32> to vector<8x2xf32>
    %69 = arith.subf %65, %68 : vector<8x2xf32>
    %70 = math.exp %69 : vector<8x2xf32>
    %cst_38 = arith.constant dense<0.000000e+00> : vector<2xf32>
    %71 = vector.multi_reduction <add>, %70, %cst_38 [0] : vector<8x2xf32> to vector<2xf32>
    %72 = vector.shape_cast %71 : vector<2xf32> to vector<1x2xf32>
    %73 = tpu.reciprocal %72 {approx = true} : vector<1x2xf32> -> vector<1x2xf32>
    %74 = vector.broadcast %73 : vector<1x2xf32> to vector<8x2xf32>
    %75 = arith.mulf %70, %74 : vector<8x2xf32>
    %76 = vector.shape_cast %75 : vector<8x2xf32> to vector<8x2x1xf32>
    %77 = vector.broadcast %76 : vector<8x2x1xf32> to vector<8x2x32xf32>
    %78 = arith.mulf %77, %46 : vector<8x2x32xf32>
    %cst_39 = arith.constant dense<0.000000e+00> : vector<2x32xf32>
    %79 = vector.multi_reduction <add>, %78, %cst_39 [0] : vector<8x2x32xf32> to vector<2x32xf32>
    %c0_40 = arith.constant 0 : index
    %c0_41 = arith.constant 0 : index
    %80 = vector.load %arg19[%c0_40, %c0_41] : memref<2x32xf32, #tpu.memory_space<vmem>>, vector<2x32xf32>
    tpu.vector_store %arg19[%c0_40, %c0_41], %79 {strides = array<i32>} : memref<2x32xf32, #tpu.memory_space<vmem>>, vector<2x32xf32>,
    %c0_42 = arith.constant 0 : index
    %c0_43 = arith.constant 0 : index
    %81 = vector.load %arg16[%c0_42, %c0_43] : memref<32x37xf32, #tpu.memory_space<vmem>>, vector<32x37xf32>
    %cst_44 = arith.constant dense<0.000000e+00> : vector<2x37xf32>
    %82 = tpu.matmul %79, %81, %cst_44 {dimension_numbers = #tpu.dot_dimension_numbers<[1], [0], [0], [1], [0, 0, 1, 1], [], []>} : vector<2x32xf32>, vector<32x37xf32>, vector<2x37xf32> -> vector<2x37xf32>
    %83 = vector.extract_strided_slice %82 {offsets = [0, 0], sizes = [2, 32], strides = [1, 1]} : vector<2x37xf32> to vector<2x32xf32>
    %84 = arith.addf %44, %83 : vector<2x32xf32>
    %85 = vector.extract_strided_slice %82 {offsets = [0, 32], sizes = [2, 5], strides = [1, 1]} : vector<2x37xf32> to vector<2x5xf32>
    %86 = arith.addf %45, %85 : vector<2x5xf32>
    %c0_45 = arith.constant 0 : index
    %c0_46 = arith.constant 0 : index
    %c0_47 = arith.constant 0 : index
    %87 = vector.load %arg13[%c0_45, %c0_46, %c0_47] : memref<2x7x32xf32, #tpu.memory_space<vmem>>, vector<2x7x32xf32>
    %c0_48 = arith.constant 0 : index
    %c0_49 = arith.constant 0 : index
    %88 = vector.load %arg14[%c0_48, %c0_49] : memref<32x32xf32, #tpu.memory_space<vmem>>, vector<32x32xf32>
    %cst_50 = arith.constant dense<0.000000e+00> : vector<2x7x32xf32>
    %89 = tpu.matmul %87, %88, %cst_50 {dimension_numbers = #tpu.dot_dimension_numbers<[2], [0], [0, 1], [1], [0, 0, 0, 1, 1, 1], [], []>} : vector<2x7x32xf32>, vector<32x32xf32>, vector<2x7x32xf32> -> vector<2x7x32xf32>
    %90 = vector.shape_cast %84 : vector<2x32xf32> to vector<2x1x32xf32>
    %91 = vector.broadcast %90 : vector<2x1x32xf32> to vector<2x7x32xf32>
    %92 = arith.addf %91, %89 : vector<2x7x32xf32>
    %93 = math.tanh %92 : vector<2x7x32xf32>
    %c0_51 = arith.constant 0 : index
    %c0_52 = arith.constant 0 : index
    %94 = vector.load %arg15[%c0_51, %c0_52] : memref<1x32xf32, #tpu.memory_space<vmem>>, vector<1x32xf32>
    %95 = vector.shape_cast %94 : vector<1x32xf32> to vector<1x1x32xf32>
    %96 = vector.broadcast %95 : vector<1x1x32xf32> to vector<2x7x32xf32>
    %97 = arith.mulf %93, %96 : vector<2x7x32xf32>
    %cst_53 = arith.constant dense<0.000000e+00> : vector<2x7xf32>
    %98 = vector.multi_reduction <add>, %97, %cst_53 [2] : vector<2x7x32xf32> to vector<2x7xf32>
    %c0_54 = arith.constant 0 : index
    %c0_55 = arith.constant 0 : index
    %99 = vector.load %arg17[%c0_54, %c0_55] : memref<2x7xf32, #tpu.memory_space<vmem>>, vector<2x7xf32>
    %cst_56 = arith.constant 5.000000e-01 : f32
    %100 = vector.broadcast %cst_56 : f32 to vector<2x7xf32>
    %101 = arith.cmpf ogt, %99, %100 : vector<2x7xf32>
    %cst_57 = arith.constant -9.99999995E+11 : f32
    %102 = vector.broadcast %cst_57 : f32 to vector<2x7xf32>
    %103 = arith.select %101, %102, %98 : vector<2x7xi1>, vector<2x7xf32>
    %cst_58 = arith.constant 0.000000e+00 : f32
    %104 = vector.broadcast %cst_58 : f32 to vector<2x128xf32>
    %c0_59 = arith.constant 0 : index
    %c0_60 = arith.constant 0 : index
    %105 = vector.load %arg20[%c0_59, %c0_60] : memref<2x128xf32, #tpu.memory_space<vmem>>, vector<2x128xf32>
    tpu.vector_store %arg20[%c0_59, %c0_60], %104 {strides = array<i32>} : memref<2x128xf32, #tpu.memory_space<vmem>>, vector<2x128xf32>,
    %c0_61 = arith.constant 0 : index
    %c0_62 = arith.constant 0 : index
    %106 = vector.load %arg20[%c0_61, %c0_62] : memref<2x128xf32, #tpu.memory_space<vmem>>, vector<2x7xf32>
    tpu.vector_store %arg20[%c0_61, %c0_62], %103 {strides = array<i32>} : memref<2x128xf32, #tpu.memory_space<vmem>>, vector<2x7xf32>,
    %cst_63 = arith.constant 0.000000e+00 : f32
    %107 = vector.broadcast %cst_63 : f32 to vector<2x128xf32>
    %c0_64 = arith.constant 0 : index
    %c0_65 = arith.constant 0 : index
    %108 = vector.load %arg21[%c0_64, %c0_65] : memref<2x128xf32, #tpu.memory_space<vmem>>, vector<2x128xf32>
    tpu.vector_store %arg21[%c0_64, %c0_65], %107 {strides = array<i32>} : memref<2x128xf32, #tpu.memory_space<vmem>>, vector<2x128xf32>,
    %c0_66 = arith.constant 0 : index
    %c0_67 = arith.constant 0 : index
    %109 = vector.load %arg21[%c0_66, %c0_67] : memref<2x128xf32, #tpu.memory_space<vmem>>, vector<2x5xf32>
    tpu.vector_store %arg21[%c0_66, %c0_67], %86 {strides = array<i32>} : memref<2x128xf32, #tpu.memory_space<vmem>>, vector<2x5xf32>,
    return
  }
}

</mosaic_0001>

<llo_original>
// kernel: tpu_custom_call.1
$region0: #{tpu_custom_call.1}
  #allocation0 [shape = 'u32[]', space=smem, size = 0x4, offset = 0x4, fixed_abs, tag = 'smem constant byte address 0x4 - core index']
  #allocation1 [shape = 'u32[144,128]{1,0:T(1,128)}', space=vmem, size = 0x12000, scoped, tag = 'internal scratch']
  #allocation2 [shape = 'f32[1,1]{1,0:T(1,128)S(1)}', space=vmem, size = 0x200, scoped, tag = 'scoped memory for tpu_custom_call.1']
  %s0 = inlined_call_operand.hbm [shape: f32[2,32], index: 0, kind: input, shape index: {}]
  %s1 = inlined_call_operand.hbm [shape: f32[2,32], index: 1, kind: input, shape index: {}]
  %s2 = inlined_call_operand.vmem [shape: f32[2,1], index: 2, kind: input, shape index: {}]
  %s3 = inlined_call_operand.vmem [shape: f32[32,128], index: 3, kind: input, shape index: {}]
  %s4 = inlined_call_operand.hbm [shape: f32[1,128], index: 4, kind: input, shape index: {}]
  %s5 = inlined_call_operand.vmem [shape: f32[32,64], index: 5, kind: input, shape index: {}]
  %s6 = inlined_call_operand.hbm [shape: f32[8,2,32], index: 6, kind: input, shape index: {}]
  %s7 = inlined_call_operand.hbm [shape: f32[32,32], index: 7, kind: input, shape index: {}]
  %s8 = inlined_call_operand.hbm [shape: f32[32,69], index: 8, kind: input, shape index: {}]
  %s9 = inlined_call_operand.hbm [shape: f32[1,69], index: 9, kind: input, shape index: {}]
  %s10 = inlined_call_operand.hbm [shape: f32[1,32], index: 10, kind: input, shape index: {}]
  %s11 = inlined_call_operand.<no memory space> [shape: f32[1,1], index: 11, kind: input, shape index: {}]
  %s12 = inlined_call_operand.vmem [shape: f32[8,2], index: 12, kind: input, shape index: {}]
  %s13 = inlined_call_operand.vmem [shape: f32[2,7,32], index: 13, kind: input, shape index: {}]
  %s14 = inlined_call_operand.vmem [shape: f32[32,32], index: 14, kind: input, shape index: {}]
  %s15 = inlined_call_operand.vmem [shape: f32[1,32], index: 15, kind: input, shape index: {}]
  %s16 = inlined_call_operand.hbm [shape: f32[32,37], index: 16, kind: input, shape index: {}]
  %s17 = inlined_call_operand.vmem [shape: f32[2,7], index: 17, kind: input, shape index: {}]
  %s18 = inlined_call_operand.hbm [shape: f32[2,32], index: 18, kind: output, shape index: {0}]
  %s19 = inlined_call_operand.hbm [shape: f32[2,32], index: 19, kind: output, shape index: {1}]
  %s20 = inlined_call_operand.hbm [shape: f32[2,128], index: 20, kind: output, shape index: {2}]
  %s21 = inlined_call_operand.hbm [shape: f32[2,128], index: 21, kind: output, shape index: {3}]
  %22 = xla_tuple %s18, %s19, %s20, %s21
  %s23 = sld [smem:[#allocation0]]
  $region142: #{tpu_custom_call.1} parent=0
    _
  %s25 = ssub.s32 1, %s23
  %s26 = scalar_select 0, %s25, %s23
  %v27 = vstv %s11
  %28 = vst [vmem:[#allocation2] sm:$0x1] %v27
  $region1: #{tpu_custom_call.1} parent=0
    #allocation3 [shape = 'u8[1024]{0}', space=vmem, size = 0x400, scoped, tag = 'input window, operand 0, single buffered']
    #allocation4 [shape = 's32[1]{0}', space=sflag, size = 0x4, scoped, tag = 'scoped memory for tpu_custom_call.1']
    #allocation5 [shape = 's32[1]{0}', space=sflag, size = 0x4, scoped, tag = 'scoped memory for tpu_custom_call.1']
    #allocation6 [shape = 'u8[1024]{0}', space=vmem, size = 0x400, scoped, tag = 'input window, operand 1, single buffered']
    #allocation7 [shape = 's32[1]{0}', space=sflag, size = 0x4, scoped, tag = 'scoped memory for tpu_custom_call.1']
    #allocation8 [shape = 'u8[512]{0}', space=vmem, size = 0x400, scoped, tag = 'input window, operand 4, single buffered']
    #allocation9 [shape = 'u8[8192]{0}', space=vmem, size = 0x2000, scoped, tag = 'input window, operand 6, single buffered']
    #allocation10 [shape = 's32[1]{0}', space=sflag, size = 0x4, scoped, tag = 'scoped memory for tpu_custom_call.1']
    #allocation11 [shape = 'u8[16384]{0}', space=vmem, size = 0x4000, scoped, tag = 'input window, operand 7, single buffered']
    #allocation12 [shape = 'u8[16384]{0}', space=vmem, size = 0x4000, scoped, tag = 'input window, operand 8, single buffered']
    #allocation13 [shape = 's32[1]{0}', space=sflag, size = 0x4, scoped, tag = 'scoped memory for tpu_custom_call.1']
    #allocation14 [shape = 'u8[512]{0}', space=vmem, size = 0x400, scoped, tag = 'input window, operand 9, single buffered']
    #allocation15 [shape = 'u8[512]{0}', space=vmem, size = 0x400, scoped, tag = 'input window, operand 10, single buffered']
    #allocation16 [shape = 's32[1]{0}', space=sflag, size = 0x4, scoped, tag = 'scoped memory for tpu_custom_call.1']
    #allocation17 [shape = 'u8[16384]{0}', space=vmem, size = 0x4000, scoped, tag = 'input window, operand 16, single buffered']
    #allocation18 [shape = 'u8[1024]{0}', space=vmem, size = 0x400, scoped, tag = 'output window, operand 0, single buffered']
    #allocation19 [shape = 'u8[1024]{0}', space=vmem, size = 0x400, scoped, tag = 'output window, operand 1, single buffered']
    #allocation20 [shape = 's32[1]{0}', space=sflag, size = 0x4, scoped, tag = 'scoped memory for tpu_custom_call.1']
    #allocation21 [shape = 'u8[1024]{0}', space=vmem, size = 0x400, scoped, tag = 'output window, operand 2, single buffered']
    #allocation22 [shape = 'u8[1024]{0}', space=vmem, size = 0x400, scoped, tag = 'output window, operand 3, single buffered']
    #allocation23 [shape = 's32[1]{0}', space=sflag, size = 0x4, scoped, tag = 'scoped memory for tpu_custom_call.1']
    %29 = vsyncpa [#allocation4], 0
    %30 = vsyncpa [#allocation7], 0
    %31 = vsyncpa [#allocation10], 0
    %32 = vsyncpa [#allocation13], 0
    %33 = vsyncpa [#allocation16], 0
    %34 = vsyncpa [#allocation5], 0
    %35 = vsyncpa [#allocation20], 0
    %36 = vsyncpa [#allocation23], 0
    // Predicated region
    $region2: #{tpu_custom_call.1} parent=1 // pred_check
      _
    $region3: #{tpu_custom_call.1} parent=1 // pred_check_branch
      %38 = sbr.rel (0) target = $region5
    $region4: #{tpu_custom_call.1} parent=1 // pred_region
      %s40 = ssub.s32 32, 32
      %41 = vsyncadd [#allocation4], %s40
      %s43 = sshll.u32 [#allocation3], 4
      %s44 = int_to_ptr.vmem [resolvable:$true] %s43
      %46 = dma.hbm_to_vmem [thread:$0]  %s0, 32, %s44, [#allocation4]
    $region5: #{tpu_custom_call.1} parent=1 // pred_fallthru
      _
    // Predicated region
    $region6: #{tpu_custom_call.1} parent=1 // pred_check
      _
    $region7: #{tpu_custom_call.1} parent=1 // pred_check_branch
      %48 = sbr.rel (0) target = $region9
    $region8: #{tpu_custom_call.1} parent=1 // pred_region
      %s50 = ssub.s32 32, 32
      %51 = vsyncadd [#allocation7], %s50
      %s53 = sshll.u32 [#allocation6], 4
      %s54 = int_to_ptr.vmem [resolvable:$true] %s53
      %56 = dma.hbm_to_vmem [thread:$0]  %s1, 32, %s54, [#allocation7]
    $region9: #{tpu_custom_call.1} parent=1 // pred_fallthru
      _
    // Predicated region
    $region10: #{tpu_custom_call.1} parent=1 // pred_check
      _
    $region11: #{tpu_custom_call.1} parent=1 // pred_check_branch
      %58 = sbr.rel (0) target = $region13
    $region12: #{tpu_custom_call.1} parent=1 // pred_region
      _
    $region13: #{tpu_custom_call.1} parent=1 // pred_fallthru
      _
    // Predicated region
    $region14: #{tpu_custom_call.1} parent=1 // pred_check
      _
    $region15: #{tpu_custom_call.1} parent=1 // pred_check_branch
      %60 = sbr.rel (0) target = $region17
    $region16: #{tpu_custom_call.1} parent=1 // pred_region
      _
    $region17: #{tpu_custom_call.1} parent=1 // pred_fallthru
      _
    // Predicated region
    $region18: #{tpu_custom_call.1} parent=1 // pred_check
      _
    $region19: #{tpu_custom_call.1} parent=1 // pred_check_branch
      %62 = sbr.rel (0) target = $region21
    $region20: #{tpu_custom_call.1} parent=1 // pred_region
      %s64 = ssub.s32 16, 16
      %65 = vsyncadd [#allocation7], %s64
      %s67 = sshll.u32 [#allocation8], 4
      %s68 = int_to_ptr.vmem [resolvable:$true] %s67
      %70 = dma.hbm_to_vmem [thread:$0]  %s4, 16, %s68, [#allocation7]
    $region21: #{tpu_custom_call.1} parent=1 // pred_fallthru
      _
    // Predicated region
    $region22: #{tpu_custom_call.1} parent=1 // pred_check
      _
    $region23: #{tpu_custom_call.1} parent=1 // pred_check_branch
      %72 = sbr.rel (0) target = $region25
    $region24: #{tpu_custom_call.1} parent=1 // pred_region
      _
    $region25: #{tpu_custom_call.1} parent=1 // pred_fallthru
      _
    // Predicated region
    $region26: #{tpu_custom_call.1} parent=1 // pred_check
      _
    $region27: #{tpu_custom_call.1} parent=1 // pred_check_branch
      %74 = sbr.rel (0) target = $region29
    $region28: #{tpu_custom_call.1} parent=1 // pred_region
      %s76 = ssub.s32 256, 256
      %77 = vsyncadd [#allocation10], %s76
      %s78 = sshll.u32 [#allocation9], 4
      %s79 = int_to_ptr.vmem [resolvable:$true] %s78
      %84 = dma.hbm_to_vmem [thread:$0]  %s6, 256, %s79, [#allocation10], 32, 32, 2
    $region29: #{tpu_custom_call.1} parent=1 // pred_fallthru
      _
    // Predicated region
    $region30: #{tpu_custom_call.1} parent=1 // pred_check
      _
    $region31: #{tpu_custom_call.1} parent=1 // pred_check_branch
      %86 = sbr.rel (0) target = $region33
    $region32: #{tpu_custom_call.1} parent=1 // pred_region
      %s88 = ssub.s32 512, 512
      %89 = vsyncadd [#allocation10], %s88
      %s90 = sshll.u32 [#allocation11], 4
      %s91 = int_to_ptr.vmem [resolvable:$true] %s90
      %96 = dma.hbm_to_vmem [thread:$0]  %s7, 512, %s91, [#allocation10], 128, 128, 8
    $region33: #{tpu_custom_call.1} parent=1 // pred_fallthru
      _
    // Predicated region
    $region34: #{tpu_custom_call.1} parent=1 // pred_check
      _
    $region35: #{tpu_custom_call.1} parent=1 // pred_check_branch
      %98 = sbr.rel (0) target = $region37
    $region36: #{tpu_custom_call.1} parent=1 // pred_region
      %s100 = ssub.s32 512, 512
      %101 = vsyncadd [#allocation13], %s100
      %s102 = sshll.u32 [#allocation12], 4
      %s103 = int_to_ptr.vmem [resolvable:$true] %s102
      %108 = dma.hbm_to_vmem [thread:$0]  %s8, 512, %s103, [#allocation13], 128, 128, 8
    $region37: #{tpu_custom_call.1} parent=1 // pred_fallthru
      _
    // Predicated region
    $region38: #{tpu_custom_call.1} parent=1 // pred_check
      _
    $region39: #{tpu_custom_call.1} parent=1 // pred_check_branch
      %110 = sbr.rel (0) target = $region41
    $region40: #{tpu_custom_call.1} parent=1 // pred_region
      %s112 = ssub.s32 16, 16
      %113 = vsyncadd [#allocation13], %s112
      %s115 = sshll.u32 [#allocation14], 4
      %s116 = int_to_ptr.vmem [resolvable:$true] %s115
      %118 = dma.hbm_to_vmem [thread:$0]  %s9, 16, %s116, [#allocation13]
    $region41: #{tpu_custom_call.1} parent=1 // pred_fallthru
      _
    // Predicated region
    $region42: #{tpu_custom_call.1} parent=1 // pred_check
      _
    $region43: #{tpu_custom_call.1} parent=1 // pred_check_branch
      %120 = sbr.rel (0) target = $region45
    $region44: #{tpu_custom_call.1} parent=1 // pred_region
      %s122 = ssub.s32 16, 16
      %123 = vsyncadd [#allocation16], %s122
      %s125 = sshll.u32 [#allocation15], 4
      %s126 = int_to_ptr.vmem [resolvable:$true] %s125
      %128 = dma.hbm_to_vmem [thread:$0]  %s10, 16, %s126, [#allocation16]
    $region45: #{tpu_custom_call.1} parent=1 // pred_fallthru
      _
    // Predicated region
    $region46: #{tpu_custom_call.1} parent=1 // pred_check
      _
    $region47: #{tpu_custom_call.1} parent=1 // pred_check_branch
      %130 = sbr.rel (0) target = $region49
    $region48: #{tpu_custom_call.1} parent=1 // pred_region
      _
    $region49: #{tpu_custom_call.1} parent=1 // pred_fallthru
      _
    // Predicated region
    $region50: #{tpu_custom_call.1} parent=1 // pred_check
      _
    $region51: #{tpu_custom_call.1} parent=1 // pred_check_branch
      %132 = sbr.rel (0) target = $region53
    $region52: #{tpu_custom_call.1} parent=1 // pred_region
      _
    $region53: #{tpu_custom_call.1} parent=1 // pred_fallthru
      _
    // Predicated region
    $region54: #{tpu_custom_call.1} parent=1 // pred_check
      _
    $region55: #{tpu_custom_call.1} parent=1 // pred_check_branch
      %134 = sbr.rel (0) target = $region57
    $region56: #{tpu_custom_call.1} parent=1 // pred_region
      _
    $region57: #{tpu_custom_call.1} parent=1 // pred_fallthru
      _
    // Predicated region
    $region58: #{tpu_custom_call.1} parent=1 // pred_check
      _
    $region59: #{tpu_custom_call.1} parent=1 // pred_check_branch
      %136 = sbr.rel (0) target = $region61
    $region60: #{tpu_custom_call.1} parent=1 // pred_region
      _
    $region61: #{tpu_custom_call.1} parent=1 // pred_fallthru
      _
    // Predicated region
    $region62: #{tpu_custom_call.1} parent=1 // pred_check
      _
    $region63: #{tpu_custom_call.1} parent=1 // pred_check_branch
      %138 = sbr.rel (0) target = $region65
    $region64: #{tpu_custom_call.1} parent=1 // pred_region
      _
    $region65: #{tpu_custom_call.1} parent=1 // pred_fallthru
      _
    // Predicated region
    $region66: #{tpu_custom_call.1} parent=1 // pred_check
      _
    $region67: #{tpu_custom_call.1} parent=1 // pred_check_branch
      %140 = sbr.rel (0) target = $region69
    $region68: #{tpu_custom_call.1} parent=1 // pred_region
      %s142 = ssub.s32 512, 512
      %143 = vsyncadd [#allocation16], %s142
      %s144 = sshll.u32 [#allocation17], 4
      %s145 = int_to_ptr.vmem [resolvable:$true] %s144
      %150 = dma.hbm_to_vmem [thread:$0]  %s16, 512, %s145, [#allocation16], 128, 128, 8
    $region69: #{tpu_custom_call.1} parent=1 // pred_fallthru
      _
    // Predicated region
    $region70: #{tpu_custom_call.1} parent=1 // pred_check
      _
    $region71: #{tpu_custom_call.1} parent=1 // pred_check_branch
      %152 = sbr.rel (0) target = $region73
    $region72: #{tpu_custom_call.1} parent=1 // pred_region
      _
    $region73: #{tpu_custom_call.1} parent=1 // pred_fallthru
      _
    // Predicated region
    $region74: #{tpu_custom_call.1} parent=1 // pred_check
      _
    $region75: #{tpu_custom_call.1} parent=1 // pred_check_branch
      %154 = sbr.rel (0) target = $region77
    $region76: #{tpu_custom_call.1} parent=1 // pred_region
      %155 = dma.done [#allocation4], 32
    $region77: #{tpu_custom_call.1} parent=1 // pred_fallthru
      _
    // Predicated region
    $region78: #{tpu_custom_call.1} parent=1 // pred_check
      _
    $region79: #{tpu_custom_call.1} parent=1 // pred_check_branch
      %157 = sbr.rel (0) target = $region81
    $region80: #{tpu_custom_call.1} parent=1 // pred_region
      %158 = dma.done [#allocation7], 32
    $region81: #{tpu_custom_call.1} parent=1 // pred_fallthru
      _
    // Predicated region
    $region82: #{tpu_custom_call.1} parent=1 // pred_check
      _
    $region83: #{tpu_custom_call.1} parent=1 // pred_check_branch
      %160 = sbr.rel (0) target = $region85
    $region84: #{tpu_custom_call.1} parent=1 // pred_region
      %161 = dma.done [#allocation7], 16
    $region85: #{tpu_custom_call.1} parent=1 // pred_fallthru
      _
    // Predicated region
    $region86: #{tpu_custom_call.1} parent=1 // pred_check
      _
    $region87: #{tpu_custom_call.1} parent=1 // pred_check_branch
      %163 = sbr.rel (0) target = $region89
    $region88: #{tpu_custom_call.1} parent=1 // pred_region
      %164 = dma.done [#allocation10], 256
    $region89: #{tpu_custom_call.1} parent=1 // pred_fallthru
      _
    // Predicated region
    $region90: #{tpu_custom_call.1} parent=1 // pred_check
      _
    $region91: #{tpu_custom_call.1} parent=1 // pred_check_branch
      %166 = sbr.rel (0) target = $region93
    $region92: #{tpu_custom_call.1} parent=1 // pred_region
      %167 = dma.done [#allocation10], 512
    $region93: #{tpu_custom_call.1} parent=1 // pred_fallthru
      _
    // Predicated region
    $region94: #{tpu_custom_call.1} parent=1 // pred_check
      _
    $region95: #{tpu_custom_call.1} parent=1 // pred_check_branch
      %169 = sbr.rel (0) target = $region97
    $region96: #{tpu_custom_call.1} parent=1 // pred_region
      %170 = dma.done [#allocation13], 512
    $region97: #{tpu_custom_call.1} parent=1 // pred_fallthru
      _
    // Predicated region
    $region98: #{tpu_custom_call.1} parent=1 // pred_check
      _
    $region99: #{tpu_custom_call.1} parent=1 // pred_check_branch
      %172 = sbr.rel (0) target = $region101
    $region100: #{tpu_custom_call.1} parent=1 // pred_region
      %173 = dma.done [#allocation13], 16
    $region101: #{tpu_custom_call.1} parent=1 // pred_fallthru
      _
    // Predicated region
    $region102: #{tpu_custom_call.1} parent=1 // pred_check
      _
    $region103: #{tpu_custom_call.1} parent=1 // pred_check_branch
      %175 = sbr.rel (0) target = $region105
    $region104: #{tpu_custom_call.1} parent=1 // pred_region
      %176 = dma.done [#allocation16], 16
    $region105: #{tpu_custom_call.1} parent=1 // pred_fallthru
      _
    // Predicated region
    $region106: #{tpu_custom_call.1} parent=1 // pred_check
      _
    $region107: #{tpu_custom_call.1} parent=1 // pred_check_branch
      %178 = sbr.rel (0) target = $region109
    $region108: #{tpu_custom_call.1} parent=1 // pred_region
      %179 = dma.done [#allocation16], 512
    $region109: #{tpu_custom_call.1} parent=1 // pred_fallthru
      _
    %v180 = vld [vmem:[#allocation3] sm:$0x3]
    %v181 = vld [vmem:[#allocation6] sm:$0x3]
    %v182 = vld [vmem:[%s3] sm:$0xff]
    %v183 = vld [vmem:[%s3 + $0x8] sm:$0xff]
    %v184 = vld [vmem:[%s3 + $0x10] sm:$0xff]
    %v185 = vld [vmem:[%s3 + $0x18] sm:$0xff]
    %v186 = vld [vmem:[#allocation8] sm:$0x1]
    %v188 = vlaneseq
    %v189 = vshrl.u32 %v188, 7
    %v190 = vsub.s32 0, %v189
    %v191 = vrot.slane %v186, %v190
    %vm193 = vcmask 261120
    %v195 = vsel %vm193, %v180, 0
    %197 = vmatprep.subr.mxu0 0.0
    %198 = vmatpush1.msra.mxu0 %v182
    %199 = vmatprep.subr.mxu0 0.0
    %200 = vmatpush1.msra.mxu0 %v183
    %201 = vmatprep.subr.mxu0 0.0
    %202 = vmatpush1.msra.mxu0 %v184
    %203 = vmatprep.subr.mxu0 0.0
    %204 = vmatpush1.msra.mxu0 %v185
    %205 = vmatprep.subr.mxu0 0.0
    %206 = vmatpush1.msra.mxu0 0.0
    %207 = vmatprep.subr.mxu0 0.0
    %208 = vmatpush1.msra.mxu0 0.0
    %209 = vmatprep.subr.mxu0 0.0
    %210 = vmatpush1.msra.mxu0 0.0
    %211 = vmatprep.subr.mxu0 0.0
    %212 = vmatpush1.msra.mxu0 0.0
    %213 = vmatprep.subr.mxu0 0.0
    %214 = vmatpush1.msra.mxu0 0.0
    %215 = vmatprep.subr.mxu0 0.0
    %216 = vmatpush1.msra.mxu0 0.0
    %217 = vmatprep.subr.mxu0 0.0
    %218 = vmatpush1.msra.mxu0 0.0
    %219 = vmatprep.subr.mxu0 0.0
    %220 = vmatpush1.msra.mxu0 0.0
    %221 = vmatprep.subr.mxu0 0.0
    %222 = vmatpush1.msra.mxu0 0.0
    %223 = vmatprep.subr.mxu0 0.0
    %224 = vmatpush1.msra.mxu0 0.0
    %225 = vmatprep.subr.mxu0 0.0
    %226 = vmatpush1.msra.mxu0 0.0
    %227 = vmatprep.subr.mxu0 0.0
    %228 = vmatpush1.msra.mxu0 0.0
    %229 = vmatprep.subr.mxu0 0.0
    %230 = vmatpush1.msra.mxu0 0.0
    %231 = vmatprep.subr.mxu0 0.0
    %232 = vmatpush1.msra.mxu0 0.0
    %233 = vmatprep.subr.mxu0 0.0
    %234 = vmatpush1.msra.mxu0 0.0
    %235 = vmatprep.subr.mxu0 0.0
    %236 = vmatpush1.msra.mxu0 0.0
    %237 = vmatprep.subr.mxu0 0.0
    %238 = vmatpush1.msra.mxu0 0.0
    %239 = vmatprep.subr.mxu0 0.0
    %240 = vmatpush1.msra.mxu0 0.0
    %241 = vmatprep.subr.mxu0 0.0
    %242 = vmatpush1.msra.mxu0 0.0
    %243 = vmatprep.subr.mxu0 0.0
    %244 = vmatpush1.msra.mxu0 0.0
    %245 = vmatprep.subr.mxu0 0.0
    %246 = vmatpush1.msra.mxu0 0.0
    %247 = vmatprep.subr.mxu0 0.0
    %248 = vmatpush1.msra.mxu0 0.0
    %249 = vmatprep.subr.mxu0 0.0
    %250 = vmatpush1.msra.mxu0 0.0
    %251 = vmatprep.subr.mxu0 0.0
    %252 = vmatpush1.msra.mxu0 0.0
    %253 = vmatprep.subr.mxu0 0.0
    %254 = vmatpush1.msra.mxu0 0.0
    %255 = vmatprep.subr.mxu0 0.0
    %256 = vmatpush1.msra.mxu0 0.0
    %257 = vmatprep.subr.mxu0 0.0
    %258 = vmatpush1.msra.mxu0 0.0
    %259 = vmatprep.subr.mxu0 0.0
    %260 = vmatpush1.msra.mxu0 0.0
    %261 = vmatprep.mubr.f32.mxu0 0.0
    %262 = vmatmul.mubr.f32.gmra.mrb[0].mxu0 %v195
    %v263 = vpop.f32.mrb[0].mxu0
    %v264 = vadd.f32 %v191, %v263
    %v265 = vpop.f32.mrb[0].mxu0
    %266 = vdwg.mxu0
    %v267 = vld [vmem:[%s5] sm:$0xff]
    %v268 = vld [vmem:[%s5 + $0x8] sm:$0xff]
    %v269 = vld [vmem:[%s5 + $0x10] sm:$0xff]
    %v270 = vld [vmem:[%s5 + $0x18] sm:$0xff]
    %v272 = vsel %vm193, %v181, 0
    %274 = vmatprep.subr.mxu0 0.0
    %275 = vmatpush1.msra.mxu0 %v267
    %276 = vmatprep.subr.mxu0 0.0
    %277 = vmatpush1.msra.mxu0 %v268
    %278 = vmatprep.subr.mxu0 0.0
    %279 = vmatpush1.msra.mxu0 %v269
    %280 = vmatprep.subr.mxu0 0.0
    %281 = vmatpush1.msra.mxu0 %v270
    %282 = vmatprep.subr.mxu0 0.0
    %283 = vmatpush1.msra.mxu0 0.0
    %284 = vmatprep.subr.mxu0 0.0
    %285 = vmatpush1.msra.mxu0 0.0
    %286 = vmatprep.subr.mxu0 0.0
    %287 = vmatpush1.msra.mxu0 0.0
    %288 = vmatprep.subr.mxu0 0.0
    %289 = vmatpush1.msra.mxu0 0.0
    %290 = vmatprep.subr.mxu0 0.0
    %291 = vmatpush1.msra.mxu0 0.0
    %292 = vmatprep.subr.mxu0 0.0
    %293 = vmatpush1.msra.mxu0 0.0
    %294 = vmatprep.subr.mxu0 0.0
    %295 = vmatpush1.msra.mxu0 0.0
    %296 = vmatprep.subr.mxu0 0.0
    %297 = vmatpush1.msra.mxu0 0.0
    %298 = vmatprep.subr.mxu0 0.0
    %299 = vmatpush1.msra.mxu0 0.0
    %300 = vmatprep.subr.mxu0 0.0
    %301 = vmatpush1.msra.mxu0 0.0
    %302 = vmatprep.subr.mxu0 0.0
    %303 = vmatpush1.msra.mxu0 0.0
    %304 = vmatprep.subr.mxu0 0.0
    %305 = vmatpush1.msra.mxu0 0.0
    %306 = vmatprep.subr.mxu0 0.0
    %307 = vmatpush1.msra.mxu0 0.0
    %308 = vmatprep.subr.mxu0 0.0
    %309 = vmatpush1.msra.mxu0 0.0
    %310 = vmatprep.subr.mxu0 0.0
    %311 = vmatpush1.msra.mxu0 0.0
    %312 = vmatprep.subr.mxu0 0.0
    %313 = vmatpush1.msra.mxu0 0.0
    %314 = vmatprep.subr.mxu0 0.0
    %315 = vmatpush1.msra.mxu0 0.0
    %316 = vmatprep.subr.mxu0 0.0
    %317 = vmatpush1.msra.mxu0 0.0
    %318 = vmatprep.subr.mxu0 0.0
    %319 = vmatpush1.msra.mxu0 0.0
    %320 = vmatprep.subr.mxu0 0.0
    %321 = vmatpush1.msra.mxu0 0.0
    %322 = vmatprep.subr.mxu0 0.0
    %323 = vmatpush1.msra.mxu0 0.0
    %324 = vmatprep.subr.mxu0 0.0
    %325 = vmatpush1.msra.mxu0 0.0
    %326 = vmatprep.subr.mxu0 0.0
    %327 = vmatpush1.msra.mxu0 0.0
    %328 = vmatprep.subr.mxu0 0.0
    %329 = vmatpush1.msra.mxu0 0.0
    %330 = vmatprep.subr.mxu0 0.0
    %331 = vmatpush1.msra.mxu0 0.0
    %332 = vmatprep.subr.mxu0 0.0
    %333 = vmatpush1.msra.mxu0 0.0
    %334 = vmatprep.subr.mxu0 0.0
    %335 = vmatpush1.msra.mxu0 0.0
    %336 = vmatprep.subr.mxu0 0.0
    %337 = vmatpush1.msra.mxu0 0.0
    %338 = vmatprep.mubr.f32.mxu0 0.0
    %339 = vmatmul.mubr.f32.gmra.mrb[0].mxu0 %v272
    %v340 = vpop.f32.mrb[0].mxu0
    %v341 = vadd.f32 0.0, %v340
    %v342 = vpop.f32.mrb[0].mxu0
    %343 = vdwg.mxu0
    %v344 = vtanh.pop %v264
    %v345 = vxor.u32 %v264, 2147483648
    %v346 = vmul.f32 %v345, 1.442695
    %v347 = vpow.pop %v346
    %v348 = vadd.f32 %v347, 1.0
    %v349 = vrcp.pop %v348
    %v350 = vmul.f32 1.0, %v349
    %352 = vrot.lane.b32.xlu0 %v350, 96
    %v353 = vpop.permute.xlu0 %352
    %v355 = vmul.f32 %v344, %v353
    %357 = vrot.lane.b32.xlu0 %v341, 64
    %v358 = vpop.permute.xlu0 %357
    %v360 = vadd.f32 %v264, %v358
    %v361 = vtanh.pop %v360
    %v362 = vxor.u32 %v360, 2147483648
    %v363 = vmul.f32 %v362, 1.442695
    %v364 = vpow.pop %v363
    %v365 = vadd.f32 %v364, 1.0
    %v366 = vrcp.pop %v365
    %v367 = vmul.f32 1.0, %v366
    %369 = vrot.lane.b32.xlu0 %v367, 96
    %v370 = vpop.permute.xlu0 %369
    %v372 = vmul.f32 %v361, %v370
    %v373 = vld [vmem:[%s2] sm:$0x3]
    %vm374 = vcmp.gt.f32.partialorder %v373, 0.5
    %v375 = vsel %vm374, 1, 0
    %376 = vset.pattern.permute.xlu0 0
    %377 = vperm.xlu0 %376, %v375
    %v378 = vpop.permute.xlu0 %377
    %vm379 = vcmp.eq.s32.totalorder %v378, 1
    %381 = vrot.lane.b32.xlu0 %v355, 64
    %v382 = vpop.permute.xlu0 %381
    %v384 = vsel %vm379, %v372, %v382
    %386 = vrot.lane.b32.xlu0 %v384, 64
    %v387 = vpop.permute.xlu0 %386
    %vm389 = vcmask 254976
    %390 = vst.msk [vmem:[#allocation18] sm:$0x3] %vm389, %v387
    %v391 = vld [vmem:[#allocation12] sm:$0xff]
    %v392 = vld [vmem:[#allocation12 + $0x8] sm:$0xff]
    %v393 = vld [vmem:[#allocation12 + $0x10] sm:$0xff]
    %v394 = vld [vmem:[#allocation12 + $0x18] sm:$0xff]
    %v395 = vld [vmem:[#allocation14] sm:$0x1]
    %v397 = vlaneseq
    %v398 = vshrl.u32 %v397, 7
    %v399 = vsub.s32 0, %v398
    %v400 = vrot.slane %v395, %v399
    %v402 = vsel %vm193, %v387, 0
    %404 = vmatprep.subr.mxu0 0.0
    %405 = vmatpush1.msra.mxu0 %v391
    %406 = vmatprep.subr.mxu0 0.0
    %407 = vmatpush1.msra.mxu0 %v392
    %408 = vmatprep.subr.mxu0 0.0
    %409 = vmatpush1.msra.mxu0 %v393
    %410 = vmatprep.subr.mxu0 0.0
    %411 = vmatpush1.msra.mxu0 %v394
    %412 = vmatprep.subr.mxu0 0.0
    %413 = vmatpush1.msra.mxu0 0.0
    %414 = vmatprep.subr.mxu0 0.0
    %415 = vmatpush1.msra.mxu0 0.0
    %416 = vmatprep.subr.mxu0 0.0
    %417 = vmatpush1.msra.mxu0 0.0
    %418 = vmatprep.subr.mxu0 0.0
    %419 = vmatpush1.msra.mxu0 0.0
    %420 = vmatprep.subr.mxu0 0.0
    %421 = vmatpush1.msra.mxu0 0.0
    %422 = vmatprep.subr.mxu0 0.0
    %423 = vmatpush1.msra.mxu0 0.0
    %424 = vmatprep.subr.mxu0 0.0
    %425 = vmatpush1.msra.mxu0 0.0
    %426 = vmatprep.subr.mxu0 0.0
    %427 = vmatpush1.msra.mxu0 0.0
    %428 = vmatprep.subr.mxu0 0.0
    %429 = vmatpush1.msra.mxu0 0.0
    %430 = vmatprep.subr.mxu0 0.0
    %431 = vmatpush1.msra.mxu0 0.0
    %432 = vmatprep.subr.mxu0 0.0
    %433 = vmatpush1.msra.mxu0 0.0
    %434 = vmatprep.subr.mxu0 0.0
    %435 = vmatpush1.msra.mxu0 0.0
    %436 = vmatprep.subr.mxu0 0.0
    %437 = vmatpush1.msra.mxu0 0.0
    %438 = vmatprep.subr.mxu0 0.0
    %439 = vmatpush1.msra.mxu0 0.0
    %440 = vmatprep.subr.mxu0 0.0
    %441 = vmatpush1.msra.mxu0 0.0
    %442 = vmatprep.subr.mxu0 0.0
    %443 = vmatpush1.msra.mxu0 0.0
    %444 = vmatprep.subr.mxu0 0.0
    %445 = vmatpush1.msra.mxu0 0.0
    %446 = vmatprep.subr.mxu0 0.0
    %447 = vmatpush1.msra.mxu0 0.0
    %448 = vmatprep.subr.mxu0 0.0
    %449 = vmatpush1.msra.mxu0 0.0
    %450 = vmatprep.subr.mxu0 0.0
    %451 = vmatpush1.msra.mxu0 0.0
    %452 = vmatprep.subr.mxu0 0.0
    %453 = vmatpush1.msra.mxu0 0.0
    %454 = vmatprep.subr.mxu0 0.0
    %455 = vmatpush1.msra.mxu0 0.0
    %456 = vmatprep.subr.mxu0 0.0
    %457 = vmatpush1.msra.mxu0 0.0
    %458 = vmatprep.subr.mxu0 0.0
    %459 = vmatpush1.msra.mxu0 0.0
    %460 = vmatprep.subr.mxu0 0.0
    %461 = vmatpush1.msra.mxu0 0.0
    %462 = vmatprep.subr.mxu0 0.0
    %463 = vmatpush1.msra.mxu0 0.0
    %464 = vmatprep.subr.mxu0 0.0
    %465 = vmatpush1.msra.mxu0 0.0
    %466 = vmatprep.subr.mxu0 0.0
    %467 = vmatpush1.msra.mxu0 0.0
    %468 = vmatprep.mubr.f32.mxu0 0.0
    %469 = vmatmul.mubr.f32.gmra.mrb[0].mxu0 %v402
    %v470 = vpop.f32.mrb[0].mxu0
    %v471 = vadd.f32 %v400, %v470
    %v472 = vpop.f32.mrb[0].mxu0
    %473 = vdwg.mxu0
    %v474 = vld [vmem:[#allocation9] sm:$0x3]
    %v475 = vld [vmem:[#allocation9 + $0x2] sm:$0x3]
    %v476 = vld [vmem:[#allocation9 + $0x4] sm:$0x3]
    %v477 = vld [vmem:[#allocation9 + $0x6] sm:$0x3]
    %v478 = vld [vmem:[#allocation9 + $0x8] sm:$0x3]
    %v479 = vld [vmem:[#allocation9 + $0xa] sm:$0x3]
    %v480 = vld [vmem:[#allocation9 + $0xc] sm:$0x3]
    %v481 = vld [vmem:[#allocation9 + $0xe] sm:$0x3]
    %v482 = vld [vmem:[#allocation11] sm:$0xff]
    %v483 = vld [vmem:[#allocation11 + $0x8] sm:$0xff]
    %v484 = vld [vmem:[#allocation11 + $0x10] sm:$0xff]
    %v485 = vld [vmem:[#allocation11 + $0x18] sm:$0xff]
    %v494 = vcombine.low %v474, %v475
    %v495 = vcombine.low %v476, %v477
    %v497 = vunpack.c.l.s4 1983009808
    %v498 = vunpack.c.0.s8 %v497
    %v499 = vlaneseq
    %v500 = vshrl.u32 %v499, 7
    %v501 = vsub.s32 %v498, %v500
    %v502 = vrot.slane %v494, %v501
    %v504 = vunpack.c.l.s4 1983009808
    %v505 = vunpack.c.0.s8 %v504
    %v506 = vlaneseq
    %v507 = vshrl.u32 %v506, 7
    %v508 = vsub.s32 %v505, %v507
    %v509 = vrot.slane %v495, %v508
    %v510 = vcombine.low %v502, %v509
    %v511 = vcombine.low %v478, %v479
    %v512 = vcombine.low %v480, %v481
    %v514 = vunpack.c.l.s4 1983009808
    %v515 = vunpack.c.0.s8 %v514
    %v516 = vlaneseq
    %v517 = vshrl.u32 %v516, 7
    %v518 = vsub.s32 %v515, %v517
    %v519 = vrot.slane %v511, %v518
    %v521 = vunpack.c.l.s4 1983009808
    %v522 = vunpack.c.0.s8 %v521
    %v523 = vlaneseq
    %v524 = vshrl.u32 %v523, 7
    %v525 = vsub.s32 %v522, %v524
    %v526 = vrot.slane %v512, %v525
    %v527 = vcombine.low %v519, %v526
    %v528 = vsel %vm193, %v510, 0
    %v530 = vsel %vm193, %v527, 0
    %532 = vmatprep.subr.mxu0 0.0
    %533 = vmatpush1.msra.mxu0 %v482
    %534 = vmatprep.subr.mxu0 0.0
    %535 = vmatpush1.msra.mxu0 %v483
    %536 = vmatprep.subr.mxu0 0.0
    %537 = vmatpush1.msra.mxu0 %v484
    %538 = vmatprep.subr.mxu0 0.0
    %539 = vmatpush1.msra.mxu0 %v485
    %540 = vmatprep.subr.mxu0 0.0
    %541 = vmatpush1.msra.mxu0 0.0
    %542 = vmatprep.subr.mxu0 0.0
    %543 = vmatpush1.msra.mxu0 0.0
    %544 = vmatprep.subr.mxu0 0.0
    %545 = vmatpush1.msra.mxu0 0.0
    %546 = vmatprep.subr.mxu0 0.0
    %547 = vmatpush1.msra.mxu0 0.0
    %548 = vmatprep.subr.mxu0 0.0
    %549 = vmatpush1.msra.mxu0 0.0
    %550 = vmatprep.subr.mxu0 0.0
    %551 = vmatpush1.msra.mxu0 0.0
    %552 = vmatprep.subr.mxu0 0.0
    %553 = vmatpush1.msra.mxu0 0.0
    %554 = vmatprep.subr.mxu0 0.0
    %555 = vmatpush1.msra.mxu0 0.0
    %556 = vmatprep.subr.mxu0 0.0
    %557 = vmatpush1.msra.mxu0 0.0
    %558 = vmatprep.subr.mxu0 0.0
    %559 = vmatpush1.msra.mxu0 0.0
    %560 = vmatprep.subr.mxu0 0.0
    %561 = vmatpush1.msra.mxu0 0.0
    %562 = vmatprep.subr.mxu0 0.0
    %563 = vmatpush1.msra.mxu0 0.0
    %564 = vmatprep.subr.mxu0 0.0
    %565 = vmatpush1.msra.mxu0 0.0
    %566 = vmatprep.subr.mxu0 0.0
    %567 = vmatpush1.msra.mxu0 0.0
    %568 = vmatprep.subr.mxu0 0.0
    %569 = vmatpush1.msra.mxu0 0.0
    %570 = vmatprep.subr.mxu0 0.0
    %571 = vmatpush1.msra.mxu0 0.0
    %572 = vmatprep.subr.mxu0 0.0
    %573 = vmatpush1.msra.mxu0 0.0
    %574 = vmatprep.subr.mxu0 0.0
    %575 = vmatpush1.msra.mxu0 0.0
    %576 = vmatprep.subr.mxu0 0.0
    %577 = vmatpush1.msra.mxu0 0.0
    %578 = vmatprep.subr.mxu0 0.0
    %579 = vmatpush1.msra.mxu0 0.0
    %580 = vmatprep.subr.mxu0 0.0
    %581 = vmatpush1.msra.mxu0 0.0
    %582 = vmatprep.subr.mxu0 0.0
    %583 = vmatpush1.msra.mxu0 0.0
    %584 = vmatprep.subr.mxu0 0.0
    %585 = vmatpush1.msra.mxu0 0.0
    %586 = vmatprep.subr.mxu0 0.0
    %587 = vmatpush1.msra.mxu0 0.0
    %588 = vmatprep.subr.mxu0 0.0
    %589 = vmatpush1.msra.mxu0 0.0
    %590 = vmatprep.subr.mxu0 0.0
    %591 = vmatpush1.msra.mxu0 0.0
    %592 = vmatprep.subr.mxu0 0.0
    %593 = vmatpush1.msra.mxu0 0.0
    %594 = vmatprep.subr.mxu0 0.0
    %595 = vmatpush1.msra.mxu0 0.0
    %596 = vmatprep.mubr.f32.mxu0 0.0
    %597 = vmatmul.mubr.f32.gmra.mrb[0].mxu0 %v528
    %v598 = vpop.f32.mrb[0].mxu0
    %v599 = vadd.f32 0.0, %v598
    %v600 = vpop.f32.mrb[0].mxu0
    %601 = vmatprep.mubr.f32.mxu0 0.0
    %602 = vmatmul.mubr.f32.gmra.mrb[0].mxu0 %v530
    %v603 = vpop.f32.mrb[0].mxu0
    %v604 = vadd.f32 0.0, %v603
    %v605 = vpop.f32.mrb[0].mxu0
    %606 = vdwg.mxu0
    %v609 = vcombine.high %v599, %v599
    %v611 = vunpack.c.l.s4 1983009808
    %v612 = vunpack.c.0.s8 %v611
    %v613 = vlaneseq
    %v614 = vshrl.u32 %v613, 7
    %v615 = vsub.s32 %v612, %v614
    %v616 = vrot.slane %v599, %v615
    %v618 = vunpack.c.l.s4 1983009808
    %v619 = vunpack.c.0.s8 %v618
    %v620 = vlaneseq
    %v621 = vshrl.u32 %v620, 7
    %v622 = vsub.s32 %v619, %v621
    %v623 = vrot.slane %v609, %v622
    %v624 = vcombine.high %v616, %v616
    %v625 = vcombine.high %v623, %v623
    %v626 = vcombine.high %v604, %v604
    %v628 = vunpack.c.l.s4 1983009808
    %v629 = vunpack.c.0.s8 %v628
    %v630 = vlaneseq
    %v631 = vshrl.u32 %v630, 7
    %v632 = vsub.s32 %v629, %v631
    %v633 = vrot.slane %v604, %v632
    %v635 = vunpack.c.l.s4 1983009808
    %v636 = vunpack.c.0.s8 %v635
    %v637 = vlaneseq
    %v638 = vshrl.u32 %v637, 7
    %v639 = vsub.s32 %v636, %v638
    %v640 = vrot.slane %v626, %v639
    %v641 = vcombine.high %v633, %v633
    %v642 = vcombine.high %v640, %v640
    %v651 = vadd.f32 %v471, %v616
    %v652 = vadd.f32 %v471, %v624
    %v653 = vadd.f32 %v471, %v623
    %v654 = vadd.f32 %v471, %v625
    %v655 = vadd.f32 %v471, %v633
    %v656 = vadd.f32 %v471, %v641
    %v657 = vadd.f32 %v471, %v640
    %v658 = vadd.f32 %v471, %v642
    %v659 = vtanh.pop %v651
    %v660 = vtanh.pop %v652
    %v661 = vtanh.pop %v653
    %v662 = vtanh.pop %v654
    %v663 = vtanh.pop %v655
    %v664 = vtanh.pop %v656
    %v665 = vtanh.pop %v657
    %v666 = vtanh.pop %v658
    %v667 = vld [vmem:[#allocation15] sm:$0x1]
    %v669 = vlaneseq
    %v670 = vshrl.u32 %v669, 7
    %v671 = vsub.s32 0, %v670
    %v672 = vrot.slane %v667, %v671
    %v674 = vmul.f32 %v659, %v672
    %v675 = vmul.f32 %v660, %v672
    %v676 = vmul.f32 %v661, %v672
    %v677 = vmul.f32 %v662, %v672
    %v678 = vmul.f32 %v663, %v672
    %v679 = vmul.f32 %v664, %v672
    %v680 = vmul.f32 %v665, %v672
    %v681 = vmul.f32 %v666, %v672
    %v682 = vsel %vm389, %v674, 0.0
    %683 = vadd.xlane.f32.xlu0 %v682
    %v684 = vpop.xlane.xlu0 %683
    %v685 = vsel %vm389, %v675, 0.0
    %686 = vadd.xlane.f32.xlu0 %v685
    %v687 = vpop.xlane.xlu0 %686
    %v688 = vsel %vm389, %v676, 0.0
    %689 = vadd.xlane.f32.xlu0 %v688
    %v690 = vpop.xlane.xlu0 %689
    %v691 = vsel %vm389, %v677, 0.0
    %692 = vadd.xlane.f32.xlu0 %v691
    %v693 = vpop.xlane.xlu0 %692
    %v694 = vsel %vm389, %v678, 0.0
    %695 = vadd.xlane.f32.xlu0 %v694
    %v696 = vpop.xlane.xlu0 %695
    %v697 = vsel %vm389, %v679, 0.0
    %698 = vadd.xlane.f32.xlu0 %v697
    %v699 = vpop.xlane.xlu0 %698
    %v700 = vsel %vm389, %v680, 0.0
    %701 = vadd.xlane.f32.xlu0 %v700
    %v702 = vpop.xlane.xlu0 %701
    %v703 = vsel %vm389, %v681, 0.0
    %704 = vadd.xlane.f32.xlu0 %v703
    %v705 = vpop.xlane.xlu0 %704
    %v706 = vld [vmem:[#allocation2] sm:$0x1]
    %v708 = vlaneseq
    %v709 = vshrl.u32 %v708, 7
    %v710 = vsub.s32 0, %v709
    %v711 = vrot.slane %v706, %v710
    %712 = vset.pattern.permute.xlu0 0
    %713 = vperm.xlu0 %712, %v711
    %v714 = vpop.permute.xlu0 %713
    %v716 = vadd.f32 %v684, %v714
    %v717 = vadd.f32 %v687, %v714
    %v718 = vadd.f32 %v690, %v714
    %v719 = vadd.f32 %v693, %v714
    %v720 = vadd.f32 %v696, %v714
    %v721 = vadd.f32 %v699, %v714
    %v722 = vadd.f32 %v702, %v714
    %v723 = vadd.f32 %v705, %v714
    %v724 = vld [vmem:[%s12] sm:$0xff]
    %vm725 = vcmp.gt.f32.partialorder %v724, 0.5
    %v734 = vlaneseq
    %v735 = vand.u32 %v734, 127
    %v736 = vlaneseq
    %v737 = vshrl.u32 %v736, 7
    %v738 = vsub.s32 %v735, %v737
    %v739 = vrot.slane %v716, %v738
    %v740 = vlaneseq
    %v741 = vshrl.u32 %v740, 7
    %v742 = vsub.s32 %v735, %v741
    %v743 = vrot.slane %v717, %v742
    %v744 = vlaneseq
    %v745 = vshrl.u32 %v744, 7
    %v746 = vsub.s32 %v735, %v745
    %v747 = vrot.slane %v718, %v746
    %v748 = vlaneseq
    %v749 = vshrl.u32 %v748, 7
    %v750 = vsub.s32 %v735, %v749
    %v751 = vrot.slane %v719, %v750
    %v752 = vlaneseq
    %v753 = vshrl.u32 %v752, 7
    %v754 = vsub.s32 %v735, %v753
    %v755 = vrot.slane %v720, %v754
    %v756 = vlaneseq
    %v757 = vshrl.u32 %v756, 7
    %v758 = vsub.s32 %v735, %v757
    %v759 = vrot.slane %v721, %v758
    %v760 = vlaneseq
    %v761 = vshrl.u32 %v760, 7
    %v762 = vsub.s32 %v735, %v761
    %v763 = vrot.slane %v722, %v762
    %v764 = vlaneseq
    %v765 = vshrl.u32 %v764, 7
    %v766 = vsub.s32 %v735, %v765
    %v767 = vrot.slane %v723, %v766
    %vm768 = vcmask 1041409
    %v769 = vsel %vm768, %v743, %v739
    %vm770 = vcmask 1042434
    %v771 = vsel %vm770, %v747, %v769
    %vm772 = vcmask 1043459
    %v773 = vsel %vm772, %v751, %v771
    %vm774 = vcmask 1044484
    %v775 = vsel %vm774, %v755, %v773
    %vm776 = vcmask 1045509
    %v777 = vsel %vm776, %v759, %v775
    %vm778 = vcmask 1046534
    %v779 = vsel %vm778, %v763, %v777
    %vm780 = vcmask 1047559
    %v781 = vsel %vm780, %v767, %v779
    %v783 = vsel %vm725, -1e+12, %v781
    %vm784 = vcmask 15360
    %v785 = vsel %vm784, %v783, -inf
    %v786 = vrot.slane %v785, 4
    %v787 = vmax.f32 %v785, %v786
    %v788 = vrot.slane %v787, 2
    %v789 = vmax.f32 %v787, %v788
    %v790 = vrot.slane %v789, 1
    %v791 = vmax.f32 %v789, %v790
    %v792 = vsub.f32 %v783, %v791
    %v793 = vmul.f32 %v792, 1.442695
    %v794 = vpow.pop %v793
    %v795 = vsel %vm784, %v794, 0.0
    %v796 = vrot.slane %v795, 4
    %v797 = vadd.f32 %v795, %v796
    %v798 = vrot.slane %v797, 2
    %v799 = vadd.f32 %v797, %v798
    %v800 = vrot.slane %v799, 1
    %v801 = vadd.f32 %v799, %v800
    %v802 = vrcp.pop %v801
    %v803 = vmul.f32 %v794, %v802
    %v804 = vlaneseq
    %v805 = vshrl.u32 %v804, 7
    %v806 = vsub.s32 0, %v805
    %v807 = vrot.slane %v803, %v806
    %809 = vbcast.lane.b32.xlu0 %v807, 256
    %v810 = vpop.permute.xlu0 %809
    %v811 = vlaneseq
    %v812 = vshrl.u32 %v811, 7
    %v813 = vsub.s32 1, %v812
    %v814 = vrot.slane %v803, %v813
    %816 = vbcast.lane.b32.xlu0 %v814, 256
    %v817 = vpop.permute.xlu0 %816
    %v818 = vlaneseq
    %v819 = vshrl.u32 %v818, 7
    %v820 = vsub.s32 2, %v819
    %v821 = vrot.slane %v803, %v820
    %823 = vbcast.lane.b32.xlu0 %v821, 256
    %v824 = vpop.permute.xlu0 %823
    %v825 = vlaneseq
    %v826 = vshrl.u32 %v825, 7
    %v827 = vsub.s32 3, %v826
    %v828 = vrot.slane %v803, %v827
    %830 = vbcast.lane.b32.xlu0 %v828, 256
    %v831 = vpop.permute.xlu0 %830
    %v832 = vlaneseq
    %v833 = vshrl.u32 %v832, 7
    %v834 = vsub.s32 4, %v833
    %v835 = vrot.slane %v803, %v834
    %837 = vbcast.lane.b32.xlu0 %v835, 256
    %v838 = vpop.permute.xlu0 %837
    %v839 = vlaneseq
    %v840 = vshrl.u32 %v839, 7
    %v841 = vsub.s32 5, %v840
    %v842 = vrot.slane %v803, %v841
    %844 = vbcast.lane.b32.xlu0 %v842, 256
    %v845 = vpop.permute.xlu0 %844
    %v846 = vlaneseq
    %v847 = vshrl.u32 %v846, 7
    %v848 = vsub.s32 6, %v847
    %v849 = vrot.slane %v803, %v848
    %851 = vbcast.lane.b32.xlu0 %v849, 256
    %v852 = vpop.permute.xlu0 %851
    %v853 = vlaneseq
    %v854 = vshrl.u32 %v853, 7
    %v855 = vsub.s32 7, %v854
    %v856 = vrot.slane %v803, %v855
    %858 = vbcast.lane.b32.xlu0 %v856, 256
    %v859 = vpop.permute.xlu0 %858
    %v860 = vmul.f32 %v810, %v474
    %v861 = vmul.f32 %v817, %v475
    %v862 = vmul.f32 %v824, %v476
    %v863 = vmul.f32 %v831, %v477
    %v864 = vmul.f32 %v838, %v478
    %v865 = vmul.f32 %v845, %v479
    %v866 = vmul.f32 %v852, %v480
    %v867 = vmul.f32 %v859, %v481
    %v868 = vsel %vm389, %v860, 0.0
    %v869 = vsel %vm389, %v861, 0.0
    %v870 = vadd.f32 %v868, %v869
    %v871 = vsel %vm389, %v862, 0.0
    %v872 = vadd.f32 %v870, %v871
    %v873 = vsel %vm389, %v863, 0.0
    %v874 = vadd.f32 %v872, %v873
    %v875 = vsel %vm389, %v864, 0.0
    %v876 = vadd.f32 %v874, %v875
    %v877 = vsel %vm389, %v865, 0.0
    %v878 = vadd.f32 %v876, %v877
    %v879 = vsel %vm389, %v866, 0.0
    %v880 = vadd.f32 %v878, %v879
    %v881 = vsel %vm389, %v867, 0.0
    %v882 = vadd.f32 %v880, %v881
    %883 = vst.msk [vmem:[#allocation19] sm:$0x3] %vm389, %v882
    %v884 = vld [vmem:[#allocation17] sm:$0xff]
    %v885 = vld [vmem:[#allocation17 + $0x8] sm:$0xff]
    %v886 = vld [vmem:[#allocation17 + $0x10] sm:$0xff]
    %v887 = vld [vmem:[#allocation17 + $0x18] sm:$0xff]
    %v889 = vsel %vm193, %v882, 0
    %891 = vmatprep.subr.mxu0 0.0
    %892 = vmatpush1.msra.mxu0 %v884
    %893 = vmatprep.subr.mxu0 0.0
    %894 = vmatpush1.msra.mxu0 %v885
    %895 = vmatprep.subr.mxu0 0.0
    %896 = vmatpush1.msra.mxu0 %v886
    %897 = vmatprep.subr.mxu0 0.0
    %898 = vmatpush1.msra.mxu0 %v887
    %899 = vmatprep.subr.mxu0 0.0
    %900 = vmatpush1.msra.mxu0 0.0
    %901 = vmatprep.subr.mxu0 0.0
    %902 = vmatpush1.msra.mxu0 0.0
    %903 = vmatprep.subr.mxu0 0.0
    %904 = vmatpush1.msra.mxu0 0.0
    %905 = vmatprep.subr.mxu0 0.0
    %906 = vmatpush1.msra.mxu0 0.0
    %907 = vmatprep.subr.mxu0 0.0
    %908 = vmatpush1.msra.mxu0 0.0
    %909 = vmatprep.subr.mxu0 0.0
    %910 = vmatpush1.msra.mxu0 0.0
    %911 = vmatprep.subr.mxu0 0.0
    %912 = vmatpush1.msra.mxu0 0.0
    %913 = vmatprep.subr.mxu0 0.0
    %914 = vmatpush1.msra.mxu0 0.0
    %915 = vmatprep.subr.mxu0 0.0
    %916 = vmatpush1.msra.mxu0 0.0
    %917 = vmatprep.subr.mxu0 0.0
    %918 = vmatpush1.msra.mxu0 0.0
    %919 = vmatprep.subr.mxu0 0.0
    %920 = vmatpush1.msra.mxu0 0.0
    %921 = vmatprep.subr.mxu0 0.0
    %922 = vmatpush1.msra.mxu0 0.0
    %923 = vmatprep.subr.mxu0 0.0
    %924 = vmatpush1.msra.mxu0 0.0
    %925 = vmatprep.subr.mxu0 0.0
    %926 = vmatpush1.msra.mxu0 0.0
    %927 = vmatprep.subr.mxu0 0.0
    %928 = vmatpush1.msra.mxu0 0.0
    %929 = vmatprep.subr.mxu0 0.0
    %930 = vmatpush1.msra.mxu0 0.0
    %931 = vmatprep.subr.mxu0 0.0
    %932 = vmatpush1.msra.mxu0 0.0
    %933 = vmatprep.subr.mxu0 0.0
    %934 = vmatpush1.msra.mxu0 0.0
    %935 = vmatprep.subr.mxu0 0.0
    %936 = vmatpush1.msra.mxu0 0.0
    %937 = vmatprep.subr.mxu0 0.0
    %938 = vmatpush1.msra.mxu0 0.0
    %939 = vmatprep.subr.mxu0 0.0
    %940 = vmatpush1.msra.mxu0 0.0
    %941 = vmatprep.subr.mxu0 0.0
    %942 = vmatpush1.msra.mxu0 0.0
    %943 = vmatprep.subr.mxu0 0.0
    %944 = vmatpush1.msra.mxu0 0.0
    %945 = vmatprep.subr.mxu0 0.0
    %946 = vmatpush1.msra.mxu0 0.0
    %947 = vmatprep.subr.mxu0 0.0
    %948 = vmatpush1.msra.mxu0 0.0
    %949 = vmatprep.subr.mxu0 0.0
    %950 = vmatpush1.msra.mxu0 0.0
    %951 = vmatprep.subr.mxu0 0.0
    %952 = vmatpush1.msra.mxu0 0.0
    %953 = vmatprep.subr.mxu0 0.0
    %954 = vmatpush1.msra.mxu0 0.0
    %955 = vmatprep.mubr.f32.mxu0 0.0
    %956 = vmatmul.mubr.f32.gmra.mrb[0].mxu0 %v889
    %v957 = vpop.f32.mrb[0].mxu0
    %v958 = vadd.f32 0.0, %v957
    %v959 = vpop.f32.mrb[0].mxu0
    %960 = vdwg.mxu0
    %962 = vrot.lane.b32.xlu0 %v958, 32
    %v963 = vpop.permute.xlu0 %962
    %v965 = vadd.f32 %v471, %v963
    %v966 = vld [vmem:[%s13] sm:$0x7f]
    %v967 = vld [vmem:[%s13 + $0x8] sm:$0x7f]
    %v968 = vld [vmem:[%s14] sm:$0xff]
    %v969 = vld [vmem:[%s14 + $0x8] sm:$0xff]
    %v970 = vld [vmem:[%s14 + $0x10] sm:$0xff]
    %v971 = vld [vmem:[%s14 + $0x18] sm:$0xff]
    %v974 = vcombine.high %v966, %v966
    %v976 = vunpack.c.l.s4 1966171168
    %v977 = vunpack.c.0.s8 %v976
    %v978 = vlaneseq
    %v979 = vshrl.u32 %v978, 7
    %v980 = vsub.s32 %v977, %v979
    %v981 = vrot.slane %v966, %v980
    %v983 = vunpack.c.l.s4 1966171168
    %v984 = vunpack.c.0.s8 %v983
    %v985 = vlaneseq
    %v986 = vshrl.u32 %v985, 7
    %v987 = vsub.s32 %v984, %v986
    %v988 = vrot.slane %v974, %v987
    %v989 = vcombine.high %v981, %v981
    %v990 = vcombine.high %v988, %v988
    %v992 = vunpack.c.l.s4 1966171168
    %v993 = vunpack.c.0.s8 %v992
    %v994 = vlaneseq
    %v995 = vshrl.u32 %v994, 7
    %v996 = vsub.s32 %v993, %v995
    %v997 = vrot.slane %v981, %v996
    %v999 = vunpack.c.l.s4 1966171168
    %v1000 = vunpack.c.0.s8 %v999
    %v1001 = vlaneseq
    %v1002 = vshrl.u32 %v1001, 7
    %v1003 = vsub.s32 %v1000, %v1002
    %v1004 = vrot.slane %v988, %v1003
    %v1006 = vunpack.c.l.s4 1966171168
    %v1007 = vunpack.c.0.s8 %v1006
    %v1008 = vlaneseq
    %v1009 = vshrl.u32 %v1008, 7
    %v1010 = vsub.s32 %v1007, %v1009
    %v1011 = vrot.slane %v989, %v1010
    %v1013 = vunpack.c.l.s4 1966171168
    %v1014 = vunpack.c.0.s8 %v1013
    %v1015 = vlaneseq
    %v1016 = vshrl.u32 %v1015, 7
    %v1017 = vsub.s32 %v1014, %v1016
    %v1018 = vrot.slane %v990, %v1017
    %v1019 = vcombine.high %v997, %v997
    %v1020 = vcombine.high %v1004, %v1004
    %v1021 = vcombine.high %v1011, %v1011
    %v1022 = vcombine.high %v967, %v967
    %v1024 = vunpack.c.l.s4 1966171168
    %v1025 = vunpack.c.0.s8 %v1024
    %v1026 = vlaneseq
    %v1027 = vshrl.u32 %v1026, 7
    %v1028 = vsub.s32 %v1025, %v1027
    %v1029 = vrot.slane %v967, %v1028
    %v1031 = vunpack.c.l.s4 1966171168
    %v1032 = vunpack.c.0.s8 %v1031
    %v1033 = vlaneseq
    %v1034 = vshrl.u32 %v1033, 7
    %v1035 = vsub.s32 %v1032, %v1034
    %v1036 = vrot.slane %v1022, %v1035
    %v1037 = vcombine.high %v1029, %v1029
    %v1038 = vcombine.high %v1036, %v1036
    %v1040 = vunpack.c.l.s4 1966171168
    %v1041 = vunpack.c.0.s8 %v1040
    %v1042 = vlaneseq
    %v1043 = vshrl.u32 %v1042, 7
    %v1044 = vsub.s32 %v1041, %v1043
    %v1045 = vrot.slane %v1029, %v1044
    %v1047 = vunpack.c.l.s4 1966171168
    %v1048 = vunpack.c.0.s8 %v1047
    %v1049 = vlaneseq
    %v1050 = vshrl.u32 %v1049, 7
    %v1051 = vsub.s32 %v1048, %v1050
    %v1052 = vrot.slane %v1036, %v1051
    %v1054 = vunpack.c.l.s4 1966171168
    %v1055 = vunpack.c.0.s8 %v1054
    %v1056 = vlaneseq
    %v1057 = vshrl.u32 %v1056, 7
    %v1058 = vsub.s32 %v1055, %v1057
    %v1059 = vrot.slane %v1037, %v1058
    %v1061 = vunpack.c.l.s4 1966171168
    %v1062 = vunpack.c.0.s8 %v1061
    %v1063 = vlaneseq
    %v1064 = vshrl.u32 %v1063, 7
    %v1065 = vsub.s32 %v1062, %v1064
    %v1066 = vrot.slane %v1038, %v1065
    %v1067 = vcombine.high %v1045, %v1045
    %v1068 = vcombine.high %v1052, %v1052
    %v1069 = vcombine.high %v1059, %v1059
    %v1070 = vcombine.low %v997, %v1011
    %v1071 = vcombine.low %v1019, %v1021
    %v1072 = vcombine.low %v1004, %v1018
    %v1073 = vcombine.low %v1020, %v1045
    %v1075 = vunpack.c.l.s4 1966171168
    %v1076 = vunpack.c.0.s8 %v1075
    %v1077 = vlaneseq
    %v1078 = vshrl.u32 %v1077, 7
    %v1079 = vsub.s32 %v1076, %v1078
    %v1080 = vrot.slane %v1070, %v1079
    %v1082 = vunpack.c.l.s4 1966171168
    %v1083 = vunpack.c.0.s8 %v1082
    %v1084 = vlaneseq
    %v1085 = vshrl.u32 %v1084, 7
    %v1086 = vsub.s32 %v1083, %v1085
    %v1087 = vrot.slane %v1071, %v1086
    %v1089 = vunpack.c.l.s4 1966171168
    %v1090 = vunpack.c.0.s8 %v1089
    %v1091 = vlaneseq
    %v1092 = vshrl.u32 %v1091, 7
    %v1093 = vsub.s32 %v1090, %v1092
    %v1094 = vrot.slane %v1072, %v1093
    %v1096 = vunpack.c.l.s4 1966171168
    %v1097 = vunpack.c.0.s8 %v1096
    %v1098 = vlaneseq
    %v1099 = vshrl.u32 %v1098, 7
    %v1100 = vsub.s32 %v1097, %v1099
    %v1101 = vrot.slane %v1073, %v1100
    %v1102 = vcombine.low %v1080, %v1087
    %v1103 = vcombine.low %v1094, %v1101
    %v1105 = vunpack.c.l.s4 1966171168
    %v1106 = vunpack.c.0.s8 %v1105
    %v1107 = vlaneseq
    %v1108 = vshrl.u32 %v1107, 7
    %v1109 = vsub.s32 %v1106, %v1108
    %v1110 = vrot.slane %v1102, %v1109
    %v1112 = vunpack.c.l.s4 1966171168
    %v1113 = vunpack.c.0.s8 %v1112
    %v1114 = vlaneseq
    %v1115 = vshrl.u32 %v1114, 7
    %v1116 = vsub.s32 %v1113, %v1115
    %v1117 = vrot.slane %v1103, %v1116
    %v1118 = vcombine.low %v1110, %v1117
    %v1119 = vcombine.low %v1059, %v1067
    %v1120 = vcombine.low %v1069, %v1052
    %v1121 = vcombine.low %v1066, %v1068
    %v1123 = vunpack.c.l.s4 1966171168
    %v1124 = vunpack.c.0.s8 %v1123
    %v1125 = vlaneseq
    %v1126 = vshrl.u32 %v1125, 7
    %v1127 = vsub.s32 %v1124, %v1126
    %v1128 = vrot.slane %v1119, %v1127
    %v1130 = vunpack.c.l.s4 1966171168
    %v1131 = vunpack.c.0.s8 %v1130
    %v1132 = vlaneseq
    %v1133 = vshrl.u32 %v1132, 7
    %v1134 = vsub.s32 %v1131, %v1133
    %v1135 = vrot.slane %v1120, %v1134
    %v1137 = vunpack.c.l.s4 1966171168
    %v1138 = vunpack.c.0.s8 %v1137
    %v1139 = vlaneseq
    %v1140 = vshrl.u32 %v1139, 7
    %v1141 = vsub.s32 %v1138, %v1140
    %v1142 = vrot.slane %v1121, %v1141
    %v1143 = vcombine.low %v1128, %v1135
    %v1145 = vunpack.c.l.s4 1966171168
    %v1146 = vunpack.c.0.s8 %v1145
    %v1147 = vlaneseq
    %v1148 = vshrl.u32 %v1147, 7
    %v1149 = vsub.s32 %v1146, %v1148
    %v1150 = vrot.slane %v1143, %v1149
    %v1152 = vunpack.c.l.s4 1966171168
    %v1153 = vunpack.c.0.s8 %v1152
    %v1154 = vlaneseq
    %v1155 = vshrl.u32 %v1154, 7
    %v1156 = vsub.s32 %v1153, %v1155
    %v1157 = vrot.slane %v1142, %v1156
    %v1158 = vcombine.low %v1150, %v1157
    %v1159 = vsel %vm193, %v1118, 0
    %v1161 = vsel %vm193, %v1158, 0
    %1163 = vmatprep.subr.mxu0 0.0
    %1164 = vmatpush1.msra.mxu0 %v968
    %1165 = vmatprep.subr.mxu0 0.0
    %1166 = vmatpush1.msra.mxu0 %v969
    %1167 = vmatprep.subr.mxu0 0.0
    %1168 = vmatpush1.msra.mxu0 %v970
    %1169 = vmatprep.subr.mxu0 0.0
    %1170 = vmatpush1.msra.mxu0 %v971
    %1171 = vmatprep.subr.mxu0 0.0
    %1172 = vmatpush1.msra.mxu0 0.0
    %1173 = vmatprep.subr.mxu0 0.0
    %1174 = vmatpush1.msra.mxu0 0.0
    %1175 = vmatprep.subr.mxu0 0.0
    %1176 = vmatpush1.msra.mxu0 0.0
    %1177 = vmatprep.subr.mxu0 0.0
    %1178 = vmatpush1.msra.mxu0 0.0
    %1179 = vmatprep.subr.mxu0 0.0
    %1180 = vmatpush1.msra.mxu0 0.0
    %1181 = vmatprep.subr.mxu0 0.0
    %1182 = vmatpush1.msra.mxu0 0.0
    %1183 = vmatprep.subr.mxu0 0.0
    %1184 = vmatpush1.msra.mxu0 0.0
    %1185 = vmatprep.subr.mxu0 0.0
    %1186 = vmatpush1.msra.mxu0 0.0
    %1187 = vmatprep.subr.mxu0 0.0
    %1188 = vmatpush1.msra.mxu0 0.0
    %1189 = vmatprep.subr.mxu0 0.0
    %1190 = vmatpush1.msra.mxu0 0.0
    %1191 = vmatprep.subr.mxu0 0.0
    %1192 = vmatpush1.msra.mxu0 0.0
    %1193 = vmatprep.subr.mxu0 0.0
    %1194 = vmatpush1.msra.mxu0 0.0
    %1195 = vmatprep.subr.mxu0 0.0
    %1196 = vmatpush1.msra.mxu0 0.0
    %1197 = vmatprep.subr.mxu0 0.0
    %1198 = vmatpush1.msra.mxu0 0.0
    %1199 = vmatprep.subr.mxu0 0.0
    %1200 = vmatpush1.msra.mxu0 0.0
    %1201 = vmatprep.subr.mxu0 0.0
    %1202 = vmatpush1.msra.mxu0 0.0
    %1203 = vmatprep.subr.mxu0 0.0
    %1204 = vmatpush1.msra.mxu0 0.0
    %1205 = vmatprep.subr.mxu0 0.0
    %1206 = vmatpush1.msra.mxu0 0.0
    %1207 = vmatprep.subr.mxu0 0.0
    %1208 = vmatpush1.msra.mxu0 0.0
    %1209 = vmatprep.subr.mxu0 0.0
    %1210 = vmatpush1.msra.mxu0 0.0
    %1211 = vmatprep.subr.mxu0 0.0
    %1212 = vmatpush1.msra.mxu0 0.0
    %1213 = vmatprep.subr.mxu0 0.0
    %1214 = vmatpush1.msra.mxu0 0.0
    %1215 = vmatprep.subr.mxu0 0.0
    %1216 = vmatpush1.msra.mxu0 0.0
    %1217 = vmatprep.subr.mxu0 0.0
    %1218 = vmatpush1.msra.mxu0 0.0
    %1219 = vmatprep.subr.mxu0 0.0
    %1220 = vmatpush1.msra.mxu0 0.0
    %1221 = vmatprep.subr.mxu0 0.0
    %1222 = vmatpush1.msra.mxu0 0.0
    %1223 = vmatprep.subr.mxu0 0.0
    %1224 = vmatpush1.msra.mxu0 0.0
    %1225 = vmatprep.subr.mxu0 0.0
    %1226 = vmatpush1.msra.mxu0 0.0
    %1227 = vmatprep.mubr.f32.mxu0 0.0
    %1228 = vmatmul.mubr.f32.gmra.mrb[0].mxu0 %v1159
    %v1229 = vpop.f32.mrb[0].mxu0
    %v1230 = vadd.f32 0.0, %v1229
    %v1231 = vpop.f32.mrb[0].mxu0
    %1232 = vmatprep.mubr.f32.mxu0 0.0
    %1233 = vmatmul.mubr.f32.gmra.mrb[0].mxu0 %v1161
    %v1234 = vpop.f32.mrb[0].mxu0
    %v1235 = vadd.f32 0.0, %v1234
    %v1236 = vpop.f32.mrb[0].mxu0
    %1237 = vdwg.mxu0
    %v1240 = vcombine.high %v1230, %v1230
    %v1242 = vunpack.c.l.s4 1966171168
    %v1243 = vunpack.c.0.s8 %v1242
    %v1244 = vlaneseq
    %v1245 = vshrl.u32 %v1244, 7
    %v1246 = vsub.s32 %v1243, %v1245
    %v1247 = vrot.slane %v1230, %v1246
    %v1249 = vunpack.c.l.s4 1966171168
    %v1250 = vunpack.c.0.s8 %v1249
    %v1251 = vlaneseq
    %v1252 = vshrl.u32 %v1251, 7
    %v1253 = vsub.s32 %v1250, %v1252
    %v1254 = vrot.slane %v1240, %v1253
    %v1255 = vcombine.high %v1247, %v1247
    %v1256 = vcombine.high %v1254, %v1254
    %v1258 = vunpack.c.l.s4 1966171168
    %v1259 = vunpack.c.0.s8 %v1258
    %v1260 = vlaneseq
    %v1261 = vshrl.u32 %v1260, 7
    %v1262 = vsub.s32 %v1259, %v1261
    %v1263 = vrot.slane %v1247, %v1262
    %v1265 = vunpack.c.l.s4 1966171168
    %v1266 = vunpack.c.0.s8 %v1265
    %v1267 = vlaneseq
    %v1268 = vshrl.u32 %v1267, 7
    %v1269 = vsub.s32 %v1266, %v1268
    %v1270 = vrot.slane %v1254, %v1269
    %v1272 = vunpack.c.l.s4 1966171168
    %v1273 = vunpack.c.0.s8 %v1272
    %v1274 = vlaneseq
    %v1275 = vshrl.u32 %v1274, 7
    %v1276 = vsub.s32 %v1273, %v1275
    %v1277 = vrot.slane %v1255, %v1276
    %v1279 = vunpack.c.l.s4 1966171168
    %v1280 = vunpack.c.0.s8 %v1279
    %v1281 = vlaneseq
    %v1282 = vshrl.u32 %v1281, 7
    %v1283 = vsub.s32 %v1280, %v1282
    %v1284 = vrot.slane %v1256, %v1283
    %v1285 = vcombine.high %v1263, %v1263
    %v1286 = vcombine.high %v1270, %v1270
    %v1287 = vcombine.high %v1277, %v1277
    %v1288 = vcombine.high %v1284, %v1284
    %v1289 = vcombine.high %v1235, %v1235
    %v1291 = vunpack.c.l.s4 1966171168
    %v1292 = vunpack.c.0.s8 %v1291
    %v1293 = vlaneseq
    %v1294 = vshrl.u32 %v1293, 7
    %v1295 = vsub.s32 %v1292, %v1294
    %v1296 = vrot.slane %v1235, %v1295
    %v1298 = vunpack.c.l.s4 1966171168
    %v1299 = vunpack.c.0.s8 %v1298
    %v1300 = vlaneseq
    %v1301 = vshrl.u32 %v1300, 7
    %v1302 = vsub.s32 %v1299, %v1301
    %v1303 = vrot.slane %v1289, %v1302
    %v1304 = vcombine.high %v1296, %v1296
    %v1305 = vcombine.high %v1303, %v1303
    %v1307 = vunpack.c.l.s4 1966171168
    %v1308 = vunpack.c.0.s8 %v1307
    %v1309 = vlaneseq
    %v1310 = vshrl.u32 %v1309, 7
    %v1311 = vsub.s32 %v1308, %v1310
    %v1312 = vrot.slane %v1296, %v1311
    %v1314 = vunpack.c.l.s4 1966171168
    %v1315 = vunpack.c.0.s8 %v1314
    %v1316 = vlaneseq
    %v1317 = vshrl.u32 %v1316, 7
    %v1318 = vsub.s32 %v1315, %v1317
    %v1319 = vrot.slane %v1303, %v1318
    %v1321 = vunpack.c.l.s4 1966171168
    %v1322 = vunpack.c.0.s8 %v1321
    %v1323 = vlaneseq
    %v1324 = vshrl.u32 %v1323, 7
    %v1325 = vsub.s32 %v1322, %v1324
    %v1326 = vrot.slane %v1304, %v1325
    %v1328 = vunpack.c.l.s4 1966171168
    %v1329 = vunpack.c.0.s8 %v1328
    %v1330 = vlaneseq
    %v1331 = vshrl.u32 %v1330, 7
    %v1332 = vsub.s32 %v1329, %v1331
    %v1333 = vrot.slane %v1305, %v1332
    %v1334 = vcombine.high %v1312, %v1312
    %v1335 = vcombine.high %v1326, %v1326
    %v1338 = vunpack.c.l.s4 1966171168
    %v1339 = vunpack.c.0.s8 %v1338
    %v1340 = vlaneseq
    %v1341 = vshrl.u32 %v1340, 7
    %v1342 = vsub.s32 %v1339, %v1341
    %v1343 = vrot.slane %v965, %v1342
    %v1344 = vcombine.high %v1343, %v1343
    %v1346 = vunpack.c.l.s4 1966171168
    %v1347 = vunpack.c.0.s8 %v1346
    %v1348 = vlaneseq
    %v1349 = vshrl.u32 %v1348, 7
    %v1350 = vsub.s32 %v1347, %v1349
    %v1351 = vrot.slane %v1343, %v1350
    %v1353 = vunpack.c.l.s4 1966171168
    %v1354 = vunpack.c.0.s8 %v1353
    %v1355 = vlaneseq
    %v1356 = vshrl.u32 %v1355, 7
    %v1357 = vsub.s32 %v1354, %v1356
    %v1358 = vrot.slane %v1344, %v1357
    %v1359 = vlaneseq
    %v1360 = vshrl.u32 %v1359, 7
    %v1361 = vsub.s32 0, %v1360
    %v1362 = vrot.slane %v1351, %v1361
    %v1363 = vlaneseq
    %v1364 = vshrl.u32 %v1363, 7
    %v1365 = vsub.s32 0, %v1364
    %v1366 = vrot.slane %v1358, %v1365
    %v1369 = vcombine.low %v1263, %v1277
    %v1370 = vcombine.low %v1285, %v1287
    %v1371 = vcombine.low %v1270, %v1284
    %v1373 = vunpack.c.l.s4 1966171168
    %v1374 = vunpack.c.0.s8 %v1373
    %v1375 = vlaneseq
    %v1376 = vshrl.u32 %v1375, 7
    %v1377 = vsub.s32 %v1374, %v1376
    %v1378 = vrot.slane %v1369, %v1377
    %v1380 = vunpack.c.l.s4 1966171168
    %v1381 = vunpack.c.0.s8 %v1380
    %v1382 = vlaneseq
    %v1383 = vshrl.u32 %v1382, 7
    %v1384 = vsub.s32 %v1381, %v1383
    %v1385 = vrot.slane %v1370, %v1384
    %v1387 = vunpack.c.l.s4 1966171168
    %v1388 = vunpack.c.0.s8 %v1387
    %v1389 = vlaneseq
    %v1390 = vshrl.u32 %v1389, 7
    %v1391 = vsub.s32 %v1388, %v1390
    %v1392 = vrot.slane %v1371, %v1391
    %v1394 = vunpack.c.l.s4 1966171168
    %v1395 = vunpack.c.0.s8 %v1394
    %v1396 = vlaneseq
    %v1397 = vshrl.u32 %v1396, 7
    %v1398 = vsub.s32 %v1395, %v1397
    %v1399 = vrot.slane %v1286, %v1398
    %v1400 = vcombine.low %v1378, %v1385
    %v1401 = vcombine.low %v1392, %v1399
    %v1403 = vunpack.c.l.s4 1966171168
    %v1404 = vunpack.c.0.s8 %v1403
    %v1405 = vlaneseq
    %v1406 = vshrl.u32 %v1405, 7
    %v1407 = vsub.s32 %v1404, %v1406
    %v1408 = vrot.slane %v1400, %v1407
    %v1410 = vunpack.c.l.s4 1966171168
    %v1411 = vunpack.c.0.s8 %v1410
    %v1412 = vlaneseq
    %v1413 = vshrl.u32 %v1412, 7
    %v1414 = vsub.s32 %v1411, %v1413
    %v1415 = vrot.slane %v1401, %v1414
    %v1416 = vcombine.low %v1408, %v1415
    %v1417 = vcombine.low %v1288, %v1312
    %v1418 = vcombine.low %v1326, %v1334
    %v1419 = vcombine.low %v1335, %v1319
    %v1421 = vunpack.c.l.s4 1966171168
    %v1422 = vunpack.c.0.s8 %v1421
    %v1423 = vlaneseq
    %v1424 = vshrl.u32 %v1423, 7
    %v1425 = vsub.s32 %v1422, %v1424
    %v1426 = vrot.slane %v1417, %v1425
    %v1428 = vunpack.c.l.s4 1966171168
    %v1429 = vunpack.c.0.s8 %v1428
    %v1430 = vlaneseq
    %v1431 = vshrl.u32 %v1430, 7
    %v1432 = vsub.s32 %v1429, %v1431
    %v1433 = vrot.slane %v1418, %v1432
    %v1435 = vunpack.c.l.s4 1966171168
    %v1436 = vunpack.c.0.s8 %v1435
    %v1437 = vlaneseq
    %v1438 = vshrl.u32 %v1437, 7
    %v1439 = vsub.s32 %v1436, %v1438
    %v1440 = vrot.slane %v1419, %v1439
    %v1442 = vunpack.c.l.s4 1966171168
    %v1443 = vunpack.c.0.s8 %v1442
    %v1444 = vlaneseq
    %v1445 = vshrl.u32 %v1444, 7
    %v1446 = vsub.s32 %v1443, %v1445
    %v1447 = vrot.slane %v1333, %v1446
    %v1448 = vcombine.low %v1426, %v1433
    %v1449 = vcombine.low %v1440, %v1447
    %v1451 = vunpack.c.l.s4 1966171168
    %v1452 = vunpack.c.0.s8 %v1451
    %v1453 = vlaneseq
    %v1454 = vshrl.u32 %v1453, 7
    %v1455 = vsub.s32 %v1452, %v1454
    %v1456 = vrot.slane %v1448, %v1455
    %v1458 = vunpack.c.l.s4 1966171168
    %v1459 = vunpack.c.0.s8 %v1458
    %v1460 = vlaneseq
    %v1461 = vshrl.u32 %v1460, 7
    %v1462 = vsub.s32 %v1459, %v1461
    %v1463 = vrot.slane %v1449, %v1462
    %v1464 = vcombine.low %v1456, %v1463
    %1465 = vrot.lane.b32.xlu0 %v1416, 32
    %v1466 = vpop.permute.xlu0 %1465
    %1467 = vrot.lane.b32.xlu0 %v1464, 32
    %v1468 = vpop.permute.xlu0 %1467
    %v1471 = vadd.f32 %v1362, %v1466
    %v1472 = vadd.f32 %v1366, %v1468
    %v1473 = vtanh.pop %v1471
    %v1474 = vtanh.pop %v1472
    %v1475 = vld [vmem:[%s15] sm:$0x1]
    %v1477 = vlaneseq
    %v1478 = vshrl.u32 %v1477, 7
    %v1479 = vsub.s32 0, %v1478
    %v1480 = vrot.slane %v1475, %v1479
    %1481 = vrot.lane.b32.xlu0 %v1480, 32
    %v1482 = vpop.permute.xlu0 %1481
    %v1484 = vmul.f32 %v1473, %v1482
    %v1485 = vmul.f32 %v1474, %v1482
    %1488 = vrot.lane.b32.xlu0 %v1484, 96
    %v1489 = vpop.permute.xlu0 %1488
    %1490 = vrot.lane.b32.xlu0 %v1485, 96
    %v1491 = vpop.permute.xlu0 %1490
    %vm1494 = vcmask 260096
    %v1495 = vsel %vm1494, %v1489, 0.0
    %1496 = vadd.xlane.f32.xlu0 %v1495
    %v1497 = vpop.xlane.xlu0 %1496
    %v1498 = vsel %vm1494, %v1491, 0.0
    %1499 = vadd.xlane.f32.xlu0 %v1498
    %v1500 = vpop.xlane.xlu0 %1499
    %v1501 = vld [vmem:[%s17] sm:$0x3]
    %vm1502 = vcmp.gt.f32.partialorder %v1501, 0.5
    %v1505 = vlaneseq
    %v1506 = vshrl.u32 %v1505, 7
    %v1507 = vsub.s32 %v735, %v1506
    %v1508 = vrot.slane %v1497, %v1507
    %v1509 = vlaneseq
    %v1510 = vshrl.u32 %v1509, 7
    %v1511 = vsub.s32 %v735, %v1510
    %v1512 = vrot.slane %v1500, %v1511
    %v1513 = vsel %vm768, %v1512, %v1508
    %v1515 = vsel %vm1502, -1e+12, %v1513
    %1516 = vst [vmem:[#allocation21] sm:$0x3] 0.0
    %vm1517 = vcmask 50176
    %1518 = vst.msk [vmem:[#allocation21] sm:$0x3] %vm1517, %v1515
    %1519 = vst [vmem:[#allocation22] sm:$0x3] 0.0
    %1520 = vrot.lane.b32.xlu0 %v965, 64
    %v1521 = vpop.permute.xlu0 %1520
    %vm1523 = vcmask 33792
    %1524 = vst.msk [vmem:[#allocation22] sm:$0x3] %vm1523, %v1521
    // Predicated region
    $region110: #{tpu_custom_call.1} parent=1 // pred_check
      _
    $region111: #{tpu_custom_call.1} parent=1 // pred_check_branch
      %1526 = sbr.rel (0) target = $region113
    $region112: #{tpu_custom_call.1} parent=1 // pred_region
      %s1528 = ssub.s32 32, 32
      %1529 = vsyncadd [#allocation5], %s1528
      %s1531 = sshll.u32 [#allocation18], 4
      %s1532 = int_to_ptr.vmem [resolvable:$true] %s1531
      %1534 = dma.vmem_to_hbm [thread:$0]  %s1532, 32, %s18, [#allocation5]
    $region113: #{tpu_custom_call.1} parent=1 // pred_fallthru
      _
    // Predicated region
    $region114: #{tpu_custom_call.1} parent=1 // pred_check
      _
    $region115: #{tpu_custom_call.1} parent=1 // pred_check_branch
      %1536 = sbr.rel (0) target = $region117
    $region116: #{tpu_custom_call.1} parent=1 // pred_region
      %s1538 = ssub.s32 32, 32
      %1539 = vsyncadd [#allocation20], %s1538
      %s1541 = sshll.u32 [#allocation19], 4
      %s1542 = int_to_ptr.vmem [resolvable:$true] %s1541
      %1544 = dma.vmem_to_hbm [thread:$0]  %s1542, 32, %s19, [#allocation20]
    $region117: #{tpu_custom_call.1} parent=1 // pred_fallthru
      _
    // Predicated region
    $region118: #{tpu_custom_call.1} parent=1 // pred_check
      _
    $region119: #{tpu_custom_call.1} parent=1 // pred_check_branch
      %1546 = sbr.rel (0) target = $region121
    $region120: #{tpu_custom_call.1} parent=1 // pred_region
      %s1548 = ssub.s32 32, 32
      %1549 = vsyncadd [#allocation20], %s1548
      %s1551 = sshll.u32 [#allocation21], 4
      %s1552 = int_to_ptr.vmem [resolvable:$true] %s1551
      %1554 = dma.vmem_to_hbm [thread:$0]  %s1552, 32, %s20, [#allocation20]
    $region121: #{tpu_custom_call.1} parent=1 // pred_fallthru
      _
    // Predicated region
    $region122: #{tpu_custom_call.1} parent=1 // pred_check
      _
    $region123: #{tpu_custom_call.1} parent=1 // pred_check_branch
      %1556 = sbr.rel (0) target = $region125
    $region124: #{tpu_custom_call.1} parent=1 // pred_region
      %s1558 = ssub.s32 32, 32
      %1559 = vsyncadd [#allocation23], %s1558
      %s1561 = sshll.u32 [#allocation22], 4
      %s1562 = int_to_ptr.vmem [resolvable:$true] %s1561
      %1564 = dma.vmem_to_hbm [thread:$0]  %s1562, 32, %s21, [#allocation23]
    $region125: #{tpu_custom_call.1} parent=1 // pred_fallthru
      _
    // Predicated region
    $region126: #{tpu_custom_call.1} parent=1 // pred_check
      _
    $region127: #{tpu_custom_call.1} parent=1 // pred_check_branch
      %1566 = sbr.rel (0) target = $region129
    $region128: #{tpu_custom_call.1} parent=1 // pred_region
      %1567 = dma.done [#allocation5], 32
    $region129: #{tpu_custom_call.1} parent=1 // pred_fallthru
      _
    // Predicated region
    $region130: #{tpu_custom_call.1} parent=1 // pred_check
      _
    $region131: #{tpu_custom_call.1} parent=1 // pred_check_branch
      %1569 = sbr.rel (0) target = $region133
    $region132: #{tpu_custom_call.1} parent=1 // pred_region
      %1570 = dma.done [#allocation20], 32
    $region133: #{tpu_custom_call.1} parent=1 // pred_fallthru
      _
    // Predicated region
    $region134: #{tpu_custom_call.1} parent=1 // pred_check
      _
    $region135: #{tpu_custom_call.1} parent=1 // pred_check_branch
      %1572 = sbr.rel (0) target = $region137
    $region136: #{tpu_custom_call.1} parent=1 // pred_region
      %1573 = dma.done [#allocation20], 32
    $region137: #{tpu_custom_call.1} parent=1 // pred_fallthru
      _
    // Predicated region
    $region138: #{tpu_custom_call.1} parent=1 // pred_check
      _
    $region139: #{tpu_custom_call.1} parent=1 // pred_check_branch
      %1575 = sbr.rel (0) target = $region141
    $region140: #{tpu_custom_call.1} parent=1 // pred_region
      %1576 = dma.done [#allocation23], 32
    $region141: #{tpu_custom_call.1} parent=1 // pred_fallthru
      _
    %1577 = vsyncpa [#allocation4], 1
    %1578 = vsyncpa [#allocation7], 1
    %1579 = vsyncpa [#allocation10], 1
    %1580 = vsyncpa [#allocation13], 1
    %1581 = vsyncpa [#allocation16], 1
    %1582 = vsyncpa [#allocation5], 1
    %1583 = vsyncpa [#allocation20], 1
    %1584 = vsyncpa [#allocation23], 1

</llo_original>
